<compile_context>
chip_gen: v7x
topology: tpu7x:2x2x1
jax: 0.10.0
libtpu: 0.0.40
codegen_flags: <defaults>
</compile_context>

<pallas_src>
import functools
import math

import numpy as np
import jax
import jax.numpy as jnp
from jax.experimental import pallas as pl
from jax.experimental.pallas import tpu as pltpu

# ----------------------------- configuration (small, synthetic) -----------------------------
VOCAB_SIZE = 64          # token_vocab_size
HIDDEN = 32              # bert_output_size == embedding dim
ENT_OUTPUT_SIZE = 32     # cfg.ent_output_size
CTX_OUTPUT_SIZE = 32     # cfg.context_output_size
MENTION_OUTPUT_SIZE = 32 # cfg.ent_mention_output_size
CNN_FILTERS = 16         # entity/context_cnn_output_channels
CNN_KERNEL_SIZES = (2, 3)
ENT_LABELS = 18
PERM_LABELS = 120
PADDED_CLASSES = 128     # all class/vocab lane dims padded to 128 (lane-dense stores)
BATCH = 2
SEQ_WP = 12              # wordpiece sequence length
SEQ_T = 10               # token sequence length (after batched_index_select)
MAX_SPAN_WIDTH = SEQ_T
NEG_BIG = -1e9           # pad-column bias: never wins max / contributes 0 to softmax

_VMEM_SPEC = pl.BlockSpec(memory_space=pltpu.MemorySpace.VMEM)
_LOSS_SHAPE = jax.ShapeDtypeStruct((1, 1), jnp.float32)


# ----------------------------- in-kernel math helpers -----------------------------
def _gelu(x):
    c = math.sqrt(2.0 / math.pi)
    return 0.5 * x * (1.0 + jnp.tanh(c * (x + 0.044715 * x * x * x)))


def _softmax_xent(logits, labels_col):
    """Per-row CE with integer labels via iota-compare (no materialized one-hot).
    Pad columns carry -1e9 bias -> contribute ~0 to the logsumexp."""
    m = jnp.max(logits, axis=-1, keepdims=True)
    lse = m + jnp.log(jnp.sum(jnp.exp(logits - m), axis=-1, keepdims=True))
    iota = jax.lax.broadcasted_iota(jnp.int32, logits.shape, logits.ndim - 1)
    tgt = jnp.sum(jnp.where(iota == labels_col, logits, 0.0), axis=-1, keepdims=True)
    return lse - tgt                                                    # (N, 1)


def _argmax_lanes(logits):
    """First-occurrence argmax over the lane axis (max + iota-min), int32 (N, 1)."""
    v = logits.shape[-1]
    maxv = jnp.max(logits, axis=-1, keepdims=True)
    iota = jax.lax.broadcasted_iota(jnp.float32, logits.shape, logits.ndim - 1)
    idx = jnp.min(jnp.where(logits == maxv, iota, float(v)), axis=-1, keepdims=True)
    return idx.astype(jnp.int32)


def _encode(tok_ids, emb, bw, bb):
    """Embedding lookup (one-hot MXU matmul) + tied-weight GELU projection. tok_ids: (N,1) int32."""
    n = tok_ids.shape[0]
    v = emb.shape[0]
    iota = jax.lax.broadcasted_iota(jnp.int32, (n, v), 1)
    onehot = (iota == tok_ids).astype(jnp.float32)
    e = jnp.dot(onehot, emb, preferred_element_type=jnp.float32)
    return _gelu(jnp.dot(e, bw, preferred_element_type=jnp.float32) + bb)


def _gather_rows(reprs, flat_idx):
    """reprs: (M, H); flat_idx: (R, 1) int32 row ids -> (R, H) via one-hot MXU matmul."""
    m = reprs.shape[0]
    r = flat_idx.shape[0]
    iota = jax.lax.broadcasted_iota(jnp.int32, (r, m), 1)
    sel = (iota == flat_idx).astype(jnp.float32)
    return jnp.dot(sel, reprs, preferred_element_type=jnp.float32)


def _cnn_feats(x_flat, mask_flat, n_spans, width, cnn_refs, ksizes):
    """Per-tap CNN span extractor: one (N*W,H)@(H,F) matmul per tap, taps combined with static
    sublane shifts, ReLU, max-over-time; kernel sizes lane-concatenated -> (n_spans, len(ks)*F).
    TODO(synk): spans are padded to a global MAX_SPAN_WIDTH; all-zero windows past the span end
    contribute ReLU(bias) to the max (matches previous port's zero-padding semantics)."""
    x = x_flat * mask_flat                                   # zero tokens outside the span
    outs, ptr = [], 0
    for k in ksizes:
        taps = cnn_refs[ptr:ptr + k]
        bias = cnn_refs[ptr + k]
        ptr += k + 1
        p = width - k + 1
        acc = None
        for t in range(k):
            y = jnp.dot(x, taps[t][...], preferred_element_type=jnp.float32)   # (N*W, F)
            y = y.reshape(n_spans, width, -1)
            part = y[:, t:t + p, :]                           # static sublane shift
            acc = part if acc is None else acc + part
        acc = jnp.maximum(acc + bias[...], 0.0)               # (n_spans, p, F)
        best = acc[:, 0, :]
        for q in range(1, p):                                 # max-over-time on VPU
            best = jnp.maximum(best, acc[:, q, :])
        outs.append(best)
    return jnp.concatenate(outs, axis=-1)


# ----------------------------- fused per-task kernels -----------------------------
def _typing_kernel(*refs, ksizes):
    """masked_entity_typing: embed + encode + span gather + CNN + ent2hidden + 18-way CE."""
    n_cnn = sum(k + 1 for k in ksizes)
    tok_ref, emb_ref, bw_ref, bb_ref, sf_ref, sm_ref = refs[:6]
    cnn_refs = refs[6:6 + n_cnn]
    ehw_ref, ehb_ref, dw_ref, db_ref, lab_ref, loss_ref = refs[6 + n_cnn:]

    reprs = _encode(tok_ref[...], emb_ref[...], bw_ref[...], bb_ref[...])
    g = _gather_rows(reprs, sf_ref[...])
    n_spans = lab_ref.shape[0]
    width = sf_ref.shape[0] // n_spans
    feats = _cnn_feats(g, sm_ref[...], n_spans, width, cnn_refs, ksizes)
    h = _gelu(jnp.dot(feats, ehw_ref[...], preferred_element_type=jnp.float32) + ehb_ref[...])
    logits = jnp.dot(h, dw_ref[...], preferred_element_type=jnp.float32) + db_ref[...]
    per = _softmax_xent(logits, lab_ref[...])
    loss_ref[...] = jnp.sum(per, axis=0, keepdims=True) / float(n_spans)


def _mtp_kernel(tok_ref, emb_ref, bw_ref, bb_ref, mw_ref, mb_ref,
                dw_ref, db_ref, lab_ref, msk_ref, loss_ref):
    """masked_entity_token_prediction: embed + encode + masked_token_mlp + tied decoder + masked CE."""
    reprs = _encode(tok_ref[...], emb_ref[...], bw_ref[...], bb_ref[...])
    hid = _gelu(jnp.dot(reprs, mw_ref[...], preferred_element_type=jnp.float32) + mb_ref[...])
    logits = jnp.dot(hid, dw_ref[...], preferred_element_type=jnp.float32) + db_ref[...]
    per = _softmax_xent(logits, lab_ref[...]) * msk_ref[...]
    denom = jnp.maximum(jnp.sum(msk_ref[...], axis=0, keepdims=True), 1.0)  # all-zero mask -> 0
    loss_ref[...] = jnp.sum(per, axis=0, keepdims=True) / denom


def _mention_kernel(*refs, ksizes, head, batch):
    """Entity-mention feature path (encode + 2x CNN span extractors + hidden + mlp) fused with
    either the permutation decoder CE head or the confused-context rank-loss head."""
    n_cnn = sum(k + 1 for k in ksizes)
    tok_ref, emb_ref, bw_ref, bb_ref, esf_ref, esm_ref, csf_ref, csm_ref = refs[:8]
    ecnn = refs[8:8 + n_cnn]
    ccnn = refs[8 + n_cnn:8 + 2 * n_cnn]
    i = 8 + 2 * n_cnn
    ehw_ref, ehb_ref, chw_ref, chb_ref, mw_ref, mb_ref = refs[i:i + 6]
    i += 6
    if head == "perm":
        pdw_ref, pdb_ref, lab_ref, loss_ref = refs[i:]
    else:
        cfw_ref, cfb_ref, loss_ref = refs[i:]

    reprs = _encode(tok_ref[...], emb_ref[...], bw_ref[...], bb_ref[...])
    ne, nc = 2 * batch, 3 * batch
    ewidth = esf_ref.shape[0] // ne
    cwidth = csf_ref.shape[0] // nc
    eg = _gather_rows(reprs, esf_ref[...])
    cg = _gather_rows(reprs, csf_ref[...])
    ef = _cnn_feats(eg, esm_ref[...], ne, ewidth, ecnn, ksizes)
    cf = _cnn_feats(cg, csm_ref[...], nc, cwidth, ccnn, ksizes)
    ef = _gelu(jnp.dot(ef, ehw_ref[...], preferred_element_type=jnp.float32) + ehb_ref[...])
    cf = _gelu(jnp.dot(cf, chw_ref[...], preferred_element_type=jnp.float32) + chb_ref[...])
    ef = ef.reshape(batch, 2, ef.shape[-1])
    cf = cf.reshape(batch, 3, cf.shape[-1])
    feat = jnp.concatenate([cf[:, 0], ef[:, 0], cf[:, 1], ef[:, 1], cf[:, 2]], axis=-1)
    feat = _gelu(jnp.dot(feat, mw_ref[...], preferred_element_type=jnp.float32) + mb_ref[...])

    if head == "perm":
        logits = jnp.dot(feat, pdw_ref[...], preferred_element_type=jnp.float32) + pdb_ref[...]
        per = _softmax_xent(logits, lab_ref[...])
        loss_ref[...] = jnp.sum(per, axis=0, keepdims=True) / float(batch)
    else:
        # first half of the batch = confused, second half = origin (concatenated by the wrapper)
        scores = jnp.dot(feat, cfw_ref[...], preferred_element_type=jnp.float32) + cfb_ref[...]
        half = batch // 2
        d = jnp.maximum(5.0 - jnp.abs(scores[:half] - scores[half:]), 0.0)
        loss_ref[...] = jnp.sum(d, axis=0, keepdims=True) / float(half)


def _seq_decoder_kernel(hid_ref, wt_ref, b_ref, lab_ref, msk_ref, loss_ref, pred_ref):
    """Standalone seq_decoder parity: tied-weight logits + masked CE + argmax (single launch)."""
    logits = jnp.dot(hid_ref[...], wt_ref[...], preferred_element_type=jnp.float32) + b_ref[...]
    pred_ref[...] = _argmax_lanes(logits)
    per = _softmax_xent(logits, lab_ref[...]) * msk_ref[...]
    denom = jnp.maximum(jnp.sum(msk_ref[...], axis=0, keepdims=True), 1.0)
    loss_ref[...] = jnp.sum(per, axis=0, keepdims=True) / denom


# ----------------------------- jitted wrappers (one pallas_call per task) -----------------------------
def _cnn_arg_list(cnn_params):
    out = []
    for k in sorted(cnn_params):
        taps, bias = cnn_params[k]
        out.extend(taps)
        out.append(bias)
    return out


def _loss_call(kernel, args):
    return pl.pallas_call(
        kernel,
        out_shape=_LOSS_SHAPE,
        in_specs=[_VMEM_SPEC] * len(args),
        out_specs=_VMEM_SPEC,
    )(*args)


@jax.jit
def _typing_forward(params, tokens_id, span_flat, span_mask, labels):
    tok = tokens_id.reshape(-1, 1).astype(jnp.int32)
    lab = labels.reshape(-1, 1).astype(jnp.int32)
    args = [tok, params["word_emb"], params["bert_w"], params["bert_b"],
            span_flat, span_mask,
            *_cnn_arg_list(params["ent_cnn"]),
            params["ent2hidden_w"], params["ent2hidden_b"],
            params["ent_dec_w"], params["ent_dec_b"], lab]
    kern = functools.partial(_typing_kernel, ksizes=CNN_KERNEL_SIZES)
    return _loss_call(kern, args)[0, 0]


@jax.jit
def _mtp_forward(params, tokens_id, tokens_label, masked_index):
    tok = tokens_id.reshape(-1, 1).astype(jnp.int32)
    lab = tokens_label.reshape(-1, 1).astype(jnp.int32)
    msk = masked_index.reshape(-1, 1).astype(jnp.float32)
    args = [tok, params["word_emb"], params["bert_w"], params["bert_b"],
            params["mtm_w"], params["mtm_b"],
            params["mt_dec_w"], params["mt_dec_b"], lab, msk]
    return _loss_call(_mtp_kernel, args)[0, 0]


@functools.partial(jax.jit, static_argnames=("head",))
def _mention_forward(params, tokens_id, esf, esm, csf, csm, head, head_args):
    tok = tokens_id.reshape(-1, 1).astype(jnp.int32)
    batch = tokens_id.shape[0]
    args = [tok, params["word_emb"], params["bert_w"], params["bert_b"],
            esf, esm, csf, csm,
            *_cnn_arg_list(params["ent_cnn"]), *_cnn_arg_list(params["ctx_cnn"]),
            params["ent2hidden_w"], params["ent2hidden_b"],
            params["ctx2hidden_w"], params["ctx2hidden_b"],
            params["mlp_w"], params["mlp_b"]]
    if head == "perm":
        args += [params["perm_dec_w"], params["perm_dec_b"],
                 head_args[0].reshape(-1, 1).astype(jnp.int32)]
    else:
        args += [params["conf_w"], params["conf_b"]]
    kern = functools.partial(_mention_kernel, ksizes=CNN_KERNEL_SIZES, head=head, batch=batch)
    return _loss_call(kern, args)[0, 0]


# ----------------------------- host-side (numpy) span preprocessing -----------------------------
def _span_arrays(spans, bidx, tokens_index, width, seq_wp):
    """Compose span token positions with tokens_index into flat wordpiece-row indices.
    spans: (Ns, 2) inclusive [start, end] in token space; bidx: (Ns,) batch index.
    Returns (Ns*width, 1) int32 flat indices into (B*seq_wp) rows and (Ns*width, 1) f32 mask."""
    t_len = tokens_index.shape[1]
    starts, ends = spans[:, 0], spans[:, 1]
    widths = ends - starts + 1
    offs = np.arange(width)
    tok_pos = np.clip(starts[:, None] + offs[None, :], 0, t_len - 1)
    wp_pos = tokens_index[bidx[:, None], tok_pos]
    flat = (bidx[:, None] * seq_wp + wp_pos).astype(np.int32).reshape(-1, 1)
    mask = (offs[None, :] < widths[:, None]).astype(np.float32).reshape(-1, 1)
    return jnp.asarray(flat), jnp.asarray(mask)


# ----------------------------- model -----------------------------
class JointREPretrainedModel:
    def __init__(self, params):
        self.params = params
        self.max_span_width = MAX_SPAN_WIDTH
        self.token_vocab_size = VOCAB_SIZE
        self.entity_mention_index = jnp.asarray([2, 0, 3, 1, 4], jnp.int32)  # kept for parity

    # ------------------- forward dispatch -------------------
    def forward(self, batch_inputs, pretrain_task=""):
        if pretrain_task == "masked_entity_typing":
            return self.masked_entity_typing(batch_inputs)
        elif pretrain_task == "masked_entity_token_prediction":
            return self.masked_entity_token_prediction(batch_inputs)
        elif pretrain_task == "entity_mention_permutation":
            return self.permutation_prediction(batch_inputs)
        elif pretrain_task == "confused_context":
            return self.confused_context_prediction(batch_inputs)

    # ------------------- masked entity typing -------------------
    def masked_entity_typing(self, batch_inputs):
        tokens_id = np.asarray(batch_inputs["tokens_id"])
        tokens_index = np.asarray(batch_inputs["tokens_index"])
        spans, labels, bidx = [], [], []
        for bi, (ent_spans, ent_labels) in enumerate(
                zip(batch_inputs["ent_spans"], batch_inputs["ent_labels"])):
            for span, lab in zip(ent_spans, ent_labels):
                spans.append([span[0], span[1] - 1])          # inclusive end
                labels.append(lab)
                bidx.append(bi)
        spans = np.asarray(spans, np.int32)
        bidx = np.asarray(bidx, np.int32)
        span_flat, span_mask = _span_arrays(spans, bidx, tokens_index,
                                            self.max_span_width, tokens_id.shape[1])
        loss = _typing_forward(self.params, jnp.asarray(tokens_id), span_flat, span_mask,
                               jnp.asarray(np.asarray(labels, np.int32)))
        return {"loss": loss}

    # ------------------- masked entity token prediction -------------------
    def masked_entity_token_prediction(self, batch_inputs):
        # all-zero mask -> loss 0 via in-kernel clamped denominator (no host readback branch)
        loss = _mtp_forward(self.params,
                            jnp.asarray(batch_inputs["tokens_id"]),
                            jnp.asarray(batch_inputs["tokens_label"]),
                            jnp.asarray(batch_inputs["masked_index"]))
        return {"loss": loss}

    # ------------------- entity mention permutation -------------------
    def permutation_prediction(self, batch_inputs):
        tokens_id = np.asarray(batch_inputs["tokens_id"])
        tokens_index = np.asarray(batch_inputs["tokens_index"])
        esf, esm, csf, csm = self._mention_preprocess(
            tokens_index, batch_inputs["ent_mention"],
            batch_inputs["tokens_index_lens"], tokens_id.shape[1])
        loss = _mention_forward(self.params, jnp.asarray(tokens_id), esf, esm, csf, csm,
                                head="perm",
                                head_args=(jnp.asarray(batch_inputs["ent_mention_label"]),))
        return {"loss": loss}

    # ------------------- confused context -------------------
    def confused_context_prediction(self, batch_inputs):
        # concatenate confused + origin along batch: one mention-feature pass, rank loss fused
        tokens_id = np.concatenate([np.asarray(batch_inputs["confused_tokens_id"]),
                                    np.asarray(batch_inputs["origin_tokens_id"])], axis=0)
        tokens_index = np.concatenate([np.asarray(batch_inputs["confused_tokens_index"]),
                                       np.asarray(batch_inputs["origin_tokens_index"])], axis=0)
        ent_mentions = list(batch_inputs["confused_ent_mention"]) + list(batch_inputs["origin_ent_mention"])
        seq_lens = list(batch_inputs["confused_tokens_index_lens"]) + list(batch_inputs["origin_tokens_index_lens"])
        esf, esm, csf, csm = self._mention_preprocess(tokens_index, ent_mentions, seq_lens,
                                                      tokens_id.shape[1])
        loss = _mention_forward(self.params, jnp.asarray(tokens_id), esf, esm, csf, csm,
                                head="conf", head_args=())
        return {"loss": loss}

    def _mention_preprocess(self, tokens_index, ent_mentions, seq_lens, seq_wp):
        b = tokens_index.shape[0]
        ent_spans, ctx_spans = [], []
        for em, sl in zip(ent_mentions, seq_lens):
            ent_spans.append([em[0][0], em[0][1]])
            ent_spans.append([em[1][0], em[1][1]])
            ctx_spans.append([0, em[0][0]])
            ctx_spans.append([em[0][1], em[1][0]])
            ctx_spans.append([em[1][1], sl])
        ent_spans = np.asarray(ent_spans, np.int32)            # (2B, 2)
        ctx_spans = np.asarray(ctx_spans, np.int32)            # (3B, 2)
        ent_bidx = np.repeat(np.arange(b, dtype=np.int32), 2)
        ctx_bidx = np.repeat(np.arange(b, dtype=np.int32), 3)
        esf, esm = _span_arrays(ent_spans, ent_bidx, tokens_index, MAX_SPAN_WIDTH, seq_wp)
        csf, csm = _span_arrays(ctx_spans, ctx_bidx, tokens_index, MAX_SPAN_WIDTH, seq_wp)
        return esf, esm, csf, csm

    # ------------------- seq_decoder (parity helper, single launch) -------------------
    def seq_decoder(self, seq_inputs, seq_mask=None, seq_labels=None):
        b, s, h = seq_inputs.shape
        if seq_mask is None:
            seq_mask = jnp.ones((b, s), jnp.float32)
        if seq_labels is None:
            seq_labels = jnp.zeros((b, s), jnp.int32)
        hid = seq_inputs.reshape(b * s, h)
        lab = seq_labels.reshape(-1, 1).astype(jnp.int32)
        msk = seq_mask.reshape(-1, 1).astype(jnp.float32)
        loss, pred = pl.pallas_call(
            _seq_decoder_kernel,
            out_shape=(jax.ShapeDtypeStruct((1, 1), jnp.float32),
                       jax.ShapeDtypeStruct((b * s, 1), jnp.int32)),
            in_specs=[_VMEM_SPEC] * 5,
            out_specs=(_VMEM_SPEC, _VMEM_SPEC),
        )(hid, self.params["mt_dec_w"], self.params["mt_dec_b"], lab, msk)
        return {"loss": loss[0, 0], "predict": pred[:, 0].reshape(b, s)}


# ----------------------------- deterministic parameter init -----------------------------
def _pad_cols(w, total):
    pad = total - w.shape[1]
    return jnp.concatenate([w, jnp.zeros((w.shape[0], pad), w.dtype)], axis=1)


def _pad_bias(real, total):
    return jnp.concatenate([jnp.zeros((1, real), jnp.float32),
                            jnp.full((1, total - real), NEG_BIG, jnp.float32)], axis=1)


def init_params(key):
    ks = jax.random.split(key, 24)
    n = lambda k, shape: 0.02 * jax.random.normal(k, shape, jnp.float32)
    zrow = lambda d: jnp.zeros((1, d), jnp.float32)
    cnn_out = CNN_FILTERS * len(CNN_KERNEL_SIZES)

    def make_cnn(base):
        cnn = {}
        idx = base
        for k in CNN_KERNEL_SIZES:
            taps = tuple(n(ks[idx + t], (HIDDEN, CNN_FILTERS)) for t in range(k))
            idx += k
            cnn[k] = (taps, zrow(CNN_FILTERS))
        return cnn, idx

    word_emb = n(ks[0], (VOCAB_SIZE, HIDDEN))
    ent_cnn, nxt = make_cnn(2)
    ctx_cnn, nxt = make_cnn(nxt)
    params = {
        "word_emb": word_emb,
        "bert_w": n(ks[1], (HIDDEN, HIDDEN)), "bert_b": zrow(HIDDEN),
        "ent_cnn": ent_cnn,
        "ctx_cnn": ctx_cnn,
        "ent2hidden_w": n(ks[nxt], (cnn_out, ENT_OUTPUT_SIZE)), "ent2hidden_b": zrow(ENT_OUTPUT_SIZE),
        "ctx2hidden_w": n(ks[nxt + 1], (cnn_out, CTX_OUTPUT_SIZE)), "ctx2hidden_b": zrow(CTX_OUTPUT_SIZE),
        "mlp_w": n(ks[nxt + 2], (2 * ENT_OUTPUT_SIZE + 3 * CTX_OUTPUT_SIZE, MENTION_OUTPUT_SIZE)),
        "mlp_b": zrow(MENTION_OUTPUT_SIZE),
        # classifier heads: class dims padded to 128 lanes (zero weight cols, -1e9 bias cols)
        "ent_dec_w": _pad_cols(n(ks[nxt + 3], (ENT_OUTPUT_SIZE, ENT_LABELS)), PADDED_CLASSES),
        "ent_dec_b": _pad_bias(ENT_LABELS, PADDED_CLASSES),
        "mtm_w": n(ks[nxt + 4], (HIDDEN, HIDDEN)), "mtm_b": zrow(HIDDEN),
        # tied masked-token decoder weight = word_emb.T, vocab padded to 128 lanes
        "mt_dec_w": _pad_cols(word_emb.T, PADDED_CLASSES),
        "mt_dec_b": _pad_bias(VOCAB_SIZE, PADDED_CLASSES),
        "perm_dec_w": _pad_cols(n(ks[nxt + 5], (MENTION_OUTPUT_SIZE, PERM_LABELS)), PADDED_CLASSES),
        "perm_dec_b": _pad_bias(PERM_LABELS, PADDED_CLASSES),
        "conf_w": n(ks[nxt + 6], (MENTION_OUTPUT_SIZE, 1)), "conf_b": zrow(1),
    }
    return params


# ----------------------------- demo -----------------------------
if __name__ == "__main__":
    key = jax.random.PRNGKey(0)
    pkey, dkey = jax.random.split(key)
    model = JointREPretrainedModel(init_params(pkey))

    dks = jax.random.split(dkey, 8)
    tokens_id = jax.random.randint(dks[0], (BATCH, SEQ_WP), 0, VOCAB_SIZE, jnp.int32)
    tokens_index = jnp.tile(jnp.arange(SEQ_T, dtype=jnp.int32), (BATCH, 1))
    tokens_label = jax.random.randint(dks[1], (BATCH, SEQ_WP), 0, VOCAB_SIZE, jnp.int32)
    masked_index = jnp.zeros((BATCH, SEQ_WP), jnp.int32).at[0, 2].set(1).at[0, 5].set(1).at[1, 3].set(1)

    typing_inputs = {
        "tokens_id": tokens_id,
        "tokens_index": tokens_index,
        "ent_spans": [[[1, 3], [4, 7]], [[2, 5]]],
        "ent_labels": [[3, 7], [11]],
    }
    mtp_inputs = {
        "tokens_id": tokens_id,
        "masked_index": masked_index,
        "tokens_label": tokens_label,
    }
    perm_inputs = {
        "tokens_id": tokens_id,
        "tokens_index": tokens_index,
        "tokens_index_lens": [9, 9],
        "ent_mention": [[[1, 3], [5, 7]], [[2, 4], [6, 8]]],
        "ent_mention_label": jnp.asarray([17, 63], jnp.int32),
    }
    confused_tokens_id = jax.random.randint(dks[2], (BATCH, SEQ_WP), 0, VOCAB_SIZE, jnp.int32)
    conf_inputs = {
        "confused_tokens_id": confused_tokens_id,
        "confused_tokens_index": tokens_index,
        "confused_tokens_index_lens": [9, 9],
        "confused_ent_mention": [[[1, 3], [5, 7]], [[2, 4], [6, 8]]],
        "origin_tokens_id": tokens_id,
        "origin_tokens_index": tokens_index,
        "origin_tokens_index_lens": [9, 9],
        "origin_ent_mention": [[[1, 3], [5, 7]], [[2, 4], [6, 8]]],
    }

    results = {
        "masked_entity_typing": model.forward(typing_inputs, "masked_entity_typing")["loss"],
        "masked_entity_token_prediction": model.forward(mtp_inputs, "masked_entity_token_prediction")["loss"],
        "entity_mention_permutation": model.forward(perm_inputs, "entity_mention_permutation")["loss"],
        "confused_context": model.forward(conf_inputs, "confused_context")["loss"],
    }
    results = jax.block_until_ready(results)
    for v in results.values():
        assert jnp.isfinite(v), "non-finite loss"
    print("KERNEL_OK")
</pallas_src>

<mosaic_0001>
module attributes {stable_mosaic.version = 11 : i64} {
  func.func @_typing_kernel(%arg0: memref<24x1xi32, #tpu.memory_space<vmem>>, %arg1: memref<64x32xf32, #tpu.memory_space<vmem>>, %arg2: memref<32x32xf32, #tpu.memory_space<vmem>>, %arg3: memref<1x32xf32, #tpu.memory_space<vmem>>, %arg4: memref<30x1xi32, #tpu.memory_space<vmem>>, %arg5: memref<30x1xf32, #tpu.memory_space<vmem>>, %arg6: memref<32x16xf32, #tpu.memory_space<vmem>>, %arg7: memref<32x16xf32, #tpu.memory_space<vmem>>, %arg8: memref<1x16xf32, #tpu.memory_space<vmem>>, %arg9: memref<32x16xf32, #tpu.memory_space<vmem>>, %arg10: memref<32x16xf32, #tpu.memory_space<vmem>>, %arg11: memref<32x16xf32, #tpu.memory_space<vmem>>, %arg12: memref<1x16xf32, #tpu.memory_space<vmem>>, %arg13: memref<32x32xf32, #tpu.memory_space<vmem>>, %arg14: memref<1x32xf32, #tpu.memory_space<vmem>>, %arg15: memref<32x128xf32, #tpu.memory_space<vmem>>, %arg16: memref<1x128xf32, #tpu.memory_space<vmem>>, %arg17: memref<3x1xi32, #tpu.memory_space<vmem>>, %arg18: memref<1x1xf32, #tpu.memory_space<vmem>>) attributes {dimension_semantics = [], scalar_prefetch = 0 : i64, scratch_operands = 0 : i64, tpu.core_type = #tpu.core_type<tc>} {
    %c0 = arith.constant 0 : index
    %c0_0 = arith.constant 0 : index
    %0 = vector.load %arg0[%c0, %c0_0] : memref<24x1xi32, #tpu.memory_space<vmem>>, vector<24x1xi32>
    %c0_1 = arith.constant 0 : index
    %c0_2 = arith.constant 0 : index
    %1 = vector.load %arg1[%c0_1, %c0_2] : memref<64x32xf32, #tpu.memory_space<vmem>>, vector<64x32xf32>
    %c0_3 = arith.constant 0 : index
    %c0_4 = arith.constant 0 : index
    %2 = vector.load %arg2[%c0_3, %c0_4] : memref<32x32xf32, #tpu.memory_space<vmem>>, vector<32x32xf32>
    %c0_5 = arith.constant 0 : index
    %c0_6 = arith.constant 0 : index
    %3 = vector.load %arg3[%c0_5, %c0_6] : memref<1x32xf32, #tpu.memory_space<vmem>>, vector<1x32xf32>
    %4 = tpu.iota {dimensions = array<i32: 1>} : vector<24x64xi32>
    %5 = vector.broadcast %0 : vector<24x1xi32> to vector<24x64xi32>
    %6 = arith.cmpi eq, %4, %5 : vector<24x64xi32>
    %7 = arith.extui %6 : vector<24x64xi1> to vector<24x64xi32>
    %8 = arith.sitofp %7 : vector<24x64xi32> to vector<24x64xf32>
    %cst = arith.constant dense<0.000000e+00> : vector<24x32xf32>
    %9 = tpu.matmul %8, %1, %cst {dimension_numbers = #tpu.dot_dimension_numbers<[1], [0], [0], [1], [0, 0, 1, 1], [], []>} : vector<24x64xf32>, vector<64x32xf32>, vector<24x32xf32> -> vector<24x32xf32>
    %cst_7 = arith.constant dense<0.000000e+00> : vector<24x32xf32>
    %10 = tpu.matmul %9, %2, %cst_7 {dimension_numbers = #tpu.dot_dimension_numbers<[1], [0], [0], [1], [0, 0, 1, 1], [], []>} : vector<24x32xf32>, vector<32x32xf32>, vector<24x32xf32> -> vector<24x32xf32>
    %11 = vector.broadcast %3 : vector<1x32xf32> to vector<24x32xf32>
    %12 = arith.addf %10, %11 : vector<24x32xf32>
    %cst_8 = arith.constant 5.000000e-01 : f32
    %13 = vector.broadcast %cst_8 : f32 to vector<24x32xf32>
    %14 = arith.mulf %13, %12 : vector<24x32xf32>
    %cst_9 = arith.constant 4.471500e-02 : f32
    %15 = vector.broadcast %cst_9 : f32 to vector<24x32xf32>
    %16 = arith.mulf %15, %12 : vector<24x32xf32>
    %17 = arith.mulf %16, %12 : vector<24x32xf32>
    %18 = arith.mulf %17, %12 : vector<24x32xf32>
    %19 = arith.addf %12, %18 : vector<24x32xf32>
    %cst_10 = arith.constant 0.797884583 : f32
    %20 = vector.broadcast %cst_10 : f32 to vector<24x32xf32>
    %21 = arith.mulf %20, %19 : vector<24x32xf32>
    %22 = math.tanh %21 : vector<24x32xf32>
    %cst_11 = arith.constant 1.000000e+00 : f32
    %23 = vector.broadcast %cst_11 : f32 to vector<24x32xf32>
    %24 = arith.addf %23, %22 : vector<24x32xf32>
    %25 = arith.mulf %14, %24 : vector<24x32xf32>
    %c0_12 = arith.constant 0 : index
    %c0_13 = arith.constant 0 : index
    %26 = vector.load %arg4[%c0_12, %c0_13] : memref<30x1xi32, #tpu.memory_space<vmem>>, vector<30x1xi32>
    %27 = tpu.iota {dimensions = array<i32: 1>} : vector<30x24xi32>
    %28 = vector.broadcast %26 : vector<30x1xi32> to vector<30x24xi32>
    %29 = arith.cmpi eq, %27, %28 : vector<30x24xi32>
    %30 = arith.extui %29 : vector<30x24xi1> to vector<30x24xi32>
    %31 = arith.sitofp %30 : vector<30x24xi32> to vector<30x24xf32>
    %cst_14 = arith.constant dense<0.000000e+00> : vector<30x32xf32>
    %32 = tpu.matmul %31, %25, %cst_14 {dimension_numbers = #tpu.dot_dimension_numbers<[1], [0], [0], [1], [0, 0, 1, 1], [], []>} : vector<30x24xf32>, vector<24x32xf32>, vector<30x32xf32> -> vector<30x32xf32>
    %c0_15 = arith.constant 0 : index
    %c0_16 = arith.constant 0 : index
    %33 = vector.load %arg5[%c0_15, %c0_16] : memref<30x1xf32, #tpu.memory_space<vmem>>, vector<30x1xf32>
    %34 = vector.broadcast %33 : vector<30x1xf32> to vector<30x32xf32>
    %35 = arith.mulf %32, %34 : vector<30x32xf32>
    %c0_17 = arith.constant 0 : index
    %c0_18 = arith.constant 0 : index
    %36 = vector.load %arg6[%c0_17, %c0_18] : memref<32x16xf32, #tpu.memory_space<vmem>>, vector<32x16xf32>
    %cst_19 = arith.constant dense<0.000000e+00> : vector<30x16xf32>
    %37 = tpu.matmul %35, %36, %cst_19 {dimension_numbers = #tpu.dot_dimension_numbers<[1], [0], [0], [1], [0, 0, 1, 1], [], []>} : vector<30x32xf32>, vector<32x16xf32>, vector<30x16xf32> -> vector<30x16xf32>
    %38 = vector.shape_cast %37 : vector<30x16xf32> to vector<3x10x16xf32>
    %39 = vector.extract_strided_slice %38 {offsets = [0, 0, 0], sizes = [3, 9, 16], strides = [1, 1, 1]} : vector<3x10x16xf32> to vector<3x9x16xf32>
    %c0_20 = arith.constant 0 : index
    %c0_21 = arith.constant 0 : index
    %40 = vector.load %arg7[%c0_20, %c0_21] : memref<32x16xf32, #tpu.memory_space<vmem>>, vector<32x16xf32>
    %cst_22 = arith.constant dense<0.000000e+00> : vector<30x16xf32>
    %41 = tpu.matmul %35, %40, %cst_22 {dimension_numbers = #tpu.dot_dimension_numbers<[1], [0], [0], [1], [0, 0, 1, 1], [], []>} : vector<30x32xf32>, vector<32x16xf32>, vector<30x16xf32> -> vector<30x16xf32>
    %42 = vector.shape_cast %41 : vector<30x16xf32> to vector<3x10x16xf32>
    %43 = vector.extract_strided_slice %42 {offsets = [0, 1, 0], sizes = [3, 9, 16], strides = [1, 1, 1]} : vector<3x10x16xf32> to vector<3x9x16xf32>
    %44 = arith.addf %39, %43 : vector<3x9x16xf32>
    %c0_23 = arith.constant 0 : index
    %c0_24 = arith.constant 0 : index
    %45 = vector.load %arg8[%c0_23, %c0_24] : memref<1x16xf32, #tpu.memory_space<vmem>>, vector<1x16xf32>
    %46 = vector.shape_cast %45 : vector<1x16xf32> to vector<1x1x16xf32>
    %47 = vector.broadcast %46 : vector<1x1x16xf32> to vector<3x9x16xf32>
    %48 = arith.addf %44, %47 : vector<3x9x16xf32>
    %cst_25 = arith.constant 0.000000e+00 : f32
    %49 = vector.broadcast %cst_25 : f32 to vector<3x9x16xf32>
    %50 = arith.maximumf %48, %49 : vector<3x9x16xf32>
    %51 = vector.extract_strided_slice %50 {offsets = [0, 0, 0], sizes = [3, 1, 16], strides = [1, 1, 1]} : vector<3x9x16xf32> to vector<3x1x16xf32>
    %52 = vector.shape_cast %51 : vector<3x1x16xf32> to vector<3x16xf32>
    %53 = vector.extract_strided_slice %50 {offsets = [0, 1, 0], sizes = [3, 1, 16], strides = [1, 1, 1]} : vector<3x9x16xf32> to vector<3x1x16xf32>
    %54 = vector.shape_cast %53 : vector<3x1x16xf32> to vector<3x16xf32>
    %55 = arith.maximumf %52, %54 : vector<3x16xf32>
    %56 = vector.extract_strided_slice %50 {offsets = [0, 2, 0], sizes = [3, 1, 16], strides = [1, 1, 1]} : vector<3x9x16xf32> to vector<3x1x16xf32>
    %57 = vector.shape_cast %56 : vector<3x1x16xf32> to vector<3x16xf32>
    %58 = arith.maximumf %55, %57 : vector<3x16xf32>
    %59 = vector.extract_strided_slice %50 {offsets = [0, 3, 0], sizes = [3, 1, 16], strides = [1, 1, 1]} : vector<3x9x16xf32> to vector<3x1x16xf32>
    %60 = vector.shape_cast %59 : vector<3x1x16xf32> to vector<3x16xf32>
    %61 = arith.maximumf %58, %60 : vector<3x16xf32>
    %62 = vector.extract_strided_slice %50 {offsets = [0, 4, 0], sizes = [3, 1, 16], strides = [1, 1, 1]} : vector<3x9x16xf32> to vector<3x1x16xf32>
    %63 = vector.shape_cast %62 : vector<3x1x16xf32> to vector<3x16xf32>
    %64 = arith.maximumf %61, %63 : vector<3x16xf32>
    %65 = vector.extract_strided_slice %50 {offsets = [0, 5, 0], sizes = [3, 1, 16], strides = [1, 1, 1]} : vector<3x9x16xf32> to vector<3x1x16xf32>
    %66 = vector.shape_cast %65 : vector<3x1x16xf32> to vector<3x16xf32>
    %67 = arith.maximumf %64, %66 : vector<3x16xf32>
    %68 = vector.extract_strided_slice %50 {offsets = [0, 6, 0], sizes = [3, 1, 16], strides = [1, 1, 1]} : vector<3x9x16xf32> to vector<3x1x16xf32>
    %69 = vector.shape_cast %68 : vector<3x1x16xf32> to vector<3x16xf32>
    %70 = arith.maximumf %67, %69 : vector<3x16xf32>
    %71 = vector.extract_strided_slice %50 {offsets = [0, 7, 0], sizes = [3, 1, 16], strides = [1, 1, 1]} : vector<3x9x16xf32> to vector<3x1x16xf32>
    %72 = vector.shape_cast %71 : vector<3x1x16xf32> to vector<3x16xf32>
    %73 = arith.maximumf %70, %72 : vector<3x16xf32>
    %74 = vector.extract_strided_slice %50 {offsets = [0, 8, 0], sizes = [3, 1, 16], strides = [1, 1, 1]} : vector<3x9x16xf32> to vector<3x1x16xf32>
    %75 = vector.shape_cast %74 : vector<3x1x16xf32> to vector<3x16xf32>
    %76 = arith.maximumf %73, %75 : vector<3x16xf32>
    %c0_26 = arith.constant 0 : index
    %c0_27 = arith.constant 0 : index
    %77 = vector.load %arg9[%c0_26, %c0_27] : memref<32x16xf32, #tpu.memory_space<vmem>>, vector<32x16xf32>
    %cst_28 = arith.constant dense<0.000000e+00> : vector<30x16xf32>
    %78 = tpu.matmul %35, %77, %cst_28 {dimension_numbers = #tpu.dot_dimension_numbers<[1], [0], [0], [1], [0, 0, 1, 1], [], []>} : vector<30x32xf32>, vector<32x16xf32>, vector<30x16xf32> -> vector<30x16xf32>
    %79 = vector.shape_cast %78 : vector<30x16xf32> to vector<3x10x16xf32>
    %80 = vector.extract_strided_slice %79 {offsets = [0, 0, 0], sizes = [3, 8, 16], strides = [1, 1, 1]} : vector<3x10x16xf32> to vector<3x8x16xf32>
    %c0_29 = arith.constant 0 : index
    %c0_30 = arith.constant 0 : index
    %81 = vector.load %arg10[%c0_29, %c0_30] : memref<32x16xf32, #tpu.memory_space<vmem>>, vector<32x16xf32>
    %cst_31 = arith.constant dense<0.000000e+00> : vector<30x16xf32>
    %82 = tpu.matmul %35, %81, %cst_31 {dimension_numbers = #tpu.dot_dimension_numbers<[1], [0], [0], [1], [0, 0, 1, 1], [], []>} : vector<30x32xf32>, vector<32x16xf32>, vector<30x16xf32> -> vector<30x16xf32>
    %83 = vector.shape_cast %82 : vector<30x16xf32> to vector<3x10x16xf32>
    %84 = vector.extract_strided_slice %83 {offsets = [0, 1, 0], sizes = [3, 8, 16], strides = [1, 1, 1]} : vector<3x10x16xf32> to vector<3x8x16xf32>
    %85 = arith.addf %80, %84 : vector<3x8x16xf32>
    %c0_32 = arith.constant 0 : index
    %c0_33 = arith.constant 0 : index
    %86 = vector.load %arg11[%c0_32, %c0_33] : memref<32x16xf32, #tpu.memory_space<vmem>>, vector<32x16xf32>
    %cst_34 = arith.constant dense<0.000000e+00> : vector<30x16xf32>
    %87 = tpu.matmul %35, %86, %cst_34 {dimension_numbers = #tpu.dot_dimension_numbers<[1], [0], [0], [1], [0, 0, 1, 1], [], []>} : vector<30x32xf32>, vector<32x16xf32>, vector<30x16xf32> -> vector<30x16xf32>
    %88 = vector.shape_cast %87 : vector<30x16xf32> to vector<3x10x16xf32>
    %89 = vector.extract_strided_slice %88 {offsets = [0, 2, 0], sizes = [3, 8, 16], strides = [1, 1, 1]} : vector<3x10x16xf32> to vector<3x8x16xf32>
    %90 = arith.addf %85, %89 : vector<3x8x16xf32>
    %c0_35 = arith.constant 0 : index
    %c0_36 = arith.constant 0 : index
    %91 = vector.load %arg12[%c0_35, %c0_36] : memref<1x16xf32, #tpu.memory_space<vmem>>, vector<1x16xf32>
    %92 = vector.shape_cast %91 : vector<1x16xf32> to vector<1x1x16xf32>
    %93 = vector.broadcast %92 : vector<1x1x16xf32> to vector<3x8x16xf32>
    %94 = arith.addf %90, %93 : vector<3x8x16xf32>
    %cst_37 = arith.constant 0.000000e+00 : f32
    %95 = vector.broadcast %cst_37 : f32 to vector<3x8x16xf32>
    %96 = arith.maximumf %94, %95 : vector<3x8x16xf32>
    %97 = vector.extract_strided_slice %96 {offsets = [0, 0, 0], sizes = [3, 1, 16], strides = [1, 1, 1]} : vector<3x8x16xf32> to vector<3x1x16xf32>
    %98 = vector.shape_cast %97 : vector<3x1x16xf32> to vector<3x16xf32>
    %99 = vector.extract_strided_slice %96 {offsets = [0, 1, 0], sizes = [3, 1, 16], strides = [1, 1, 1]} : vector<3x8x16xf32> to vector<3x1x16xf32>
    %100 = vector.shape_cast %99 : vector<3x1x16xf32> to vector<3x16xf32>
    %101 = arith.maximumf %98, %100 : vector<3x16xf32>
    %102 = vector.extract_strided_slice %96 {offsets = [0, 2, 0], sizes = [3, 1, 16], strides = [1, 1, 1]} : vector<3x8x16xf32> to vector<3x1x16xf32>
    %103 = vector.shape_cast %102 : vector<3x1x16xf32> to vector<3x16xf32>
    %104 = arith.maximumf %101, %103 : vector<3x16xf32>
    %105 = vector.extract_strided_slice %96 {offsets = [0, 3, 0], sizes = [3, 1, 16], strides = [1, 1, 1]} : vector<3x8x16xf32> to vector<3x1x16xf32>
    %106 = vector.shape_cast %105 : vector<3x1x16xf32> to vector<3x16xf32>
    %107 = arith.maximumf %104, %106 : vector<3x16xf32>
    %108 = vector.extract_strided_slice %96 {offsets = [0, 4, 0], sizes = [3, 1, 16], strides = [1, 1, 1]} : vector<3x8x16xf32> to vector<3x1x16xf32>
    %109 = vector.shape_cast %108 : vector<3x1x16xf32> to vector<3x16xf32>
    %110 = arith.maximumf %107, %109 : vector<3x16xf32>
    %111 = vector.extract_strided_slice %96 {offsets = [0, 5, 0], sizes = [3, 1, 16], strides = [1, 1, 1]} : vector<3x8x16xf32> to vector<3x1x16xf32>
    %112 = vector.shape_cast %111 : vector<3x1x16xf32> to vector<3x16xf32>
    %113 = arith.maximumf %110, %112 : vector<3x16xf32>
    %114 = vector.extract_strided_slice %96 {offsets = [0, 6, 0], sizes = [3, 1, 16], strides = [1, 1, 1]} : vector<3x8x16xf32> to vector<3x1x16xf32>
    %115 = vector.shape_cast %114 : vector<3x1x16xf32> to vector<3x16xf32>
    %116 = arith.maximumf %113, %115 : vector<3x16xf32>
    %117 = vector.extract_strided_slice %96 {offsets = [0, 7, 0], sizes = [3, 1, 16], strides = [1, 1, 1]} : vector<3x8x16xf32> to vector<3x1x16xf32>
    %118 = vector.shape_cast %117 : vector<3x1x16xf32> to vector<3x16xf32>
    %119 = arith.maximumf %116, %118 : vector<3x16xf32>
    %120 = tpu.concatenate %76, %119 in 1 : vector<3x16xf32>, vector<3x16xf32> -> vector<3x32xf32>
    %c0_38 = arith.constant 0 : index
    %c0_39 = arith.constant 0 : index
    %121 = vector.load %arg13[%c0_38, %c0_39] : memref<32x32xf32, #tpu.memory_space<vmem>>, vector<32x32xf32>
    %cst_40 = arith.constant dense<0.000000e+00> : vector<3x32xf32>
    %122 = tpu.matmul %120, %121, %cst_40 {dimension_numbers = #tpu.dot_dimension_numbers<[1], [0], [0], [1], [0, 0, 1, 1], [], []>} : vector<3x32xf32>, vector<32x32xf32>, vector<3x32xf32> -> vector<3x32xf32>
    %c0_41 = arith.constant 0 : index
    %c0_42 = arith.constant 0 : index
    %123 = vector.load %arg14[%c0_41, %c0_42] : memref<1x32xf32, #tpu.memory_space<vmem>>, vector<1x32xf32>
    %124 = vector.broadcast %123 : vector<1x32xf32> to vector<3x32xf32>
    %125 = arith.addf %122, %124 : vector<3x32xf32>
    %cst_43 = arith.constant 5.000000e-01 : f32
    %126 = vector.broadcast %cst_43 : f32 to vector<3x32xf32>
    %127 = arith.mulf %126, %125 : vector<3x32xf32>
    %cst_44 = arith.constant 4.471500e-02 : f32
    %128 = vector.broadcast %cst_44 : f32 to vector<3x32xf32>
    %129 = arith.mulf %128, %125 : vector<3x32xf32>
    %130 = arith.mulf %129, %125 : vector<3x32xf32>
    %131 = arith.mulf %130, %125 : vector<3x32xf32>
    %132 = arith.addf %125, %131 : vector<3x32xf32>
    %cst_45 = arith.constant 0.797884583 : f32
    %133 = vector.broadcast %cst_45 : f32 to vector<3x32xf32>
    %134 = arith.mulf %133, %132 : vector<3x32xf32>
    %135 = math.tanh %134 : vector<3x32xf32>
    %cst_46 = arith.constant 1.000000e+00 : f32
    %136 = vector.broadcast %cst_46 : f32 to vector<3x32xf32>
    %137 = arith.addf %136, %135 : vector<3x32xf32>
    %138 = arith.mulf %127, %137 : vector<3x32xf32>
    %c0_47 = arith.constant 0 : index
    %c0_48 = arith.constant 0 : index
    %139 = vector.load %arg15[%c0_47, %c0_48] : memref<32x128xf32, #tpu.memory_space<vmem>>, vector<32x128xf32>
    %cst_49 = arith.constant dense<0.000000e+00> : vector<3x128xf32>
    %140 = tpu.matmul %138, %139, %cst_49 {dimension_numbers = #tpu.dot_dimension_numbers<[1], [0], [0], [1], [0, 0, 1, 1], [], []>} : vector<3x32xf32>, vector<32x128xf32>, vector<3x128xf32> -> vector<3x128xf32>
    %c0_50 = arith.constant 0 : index
    %c0_51 = arith.constant 0 : index
    %141 = vector.load %arg16[%c0_50, %c0_51] : memref<1x128xf32, #tpu.memory_space<vmem>>, vector<1x128xf32>
    %142 = vector.broadcast %141 : vector<1x128xf32> to vector<3x128xf32>
    %143 = arith.addf %140, %142 : vector<3x128xf32>
    %c0_52 = arith.constant 0 : index
    %c0_53 = arith.constant 0 : index
    %144 = vector.load %arg17[%c0_52, %c0_53] : memref<3x1xi32, #tpu.memory_space<vmem>>, vector<3x1xi32>
    %cst_54 = arith.constant dense<0xFF800000> : vector<3xf32>
    %145 = vector.multi_reduction <maximumf>, %143, %cst_54 [1] : vector<3x128xf32> to vector<3xf32>
    %146 = vector.shape_cast %145 : vector<3xf32> to vector<3x1xf32>
    %147 = vector.broadcast %146 : vector<3x1xf32> to vector<3x128xf32>
    %148 = arith.subf %143, %147 : vector<3x128xf32>
    %149 = math.exp %148 : vector<3x128xf32>
    %cst_55 = arith.constant dense<0.000000e+00> : vector<3xf32>
    %150 = vector.multi_reduction <add>, %149, %cst_55 [1] : vector<3x128xf32> to vector<3xf32>
    %151 = vector.shape_cast %150 : vector<3xf32> to vector<3x1xf32>
    %152 = math.log %151 : vector<3x1xf32>
    %153 = arith.addf %146, %152 : vector<3x1xf32>
    %154 = tpu.iota {dimensions = array<i32: 1>} : vector<3x128xi32>
    %155 = vector.broadcast %144 : vector<3x1xi32> to vector<3x128xi32>
    %156 = arith.cmpi eq, %154, %155 : vector<3x128xi32>
    %cst_56 = arith.constant 0.000000e+00 : f32
    %157 = vector.broadcast %cst_56 : f32 to vector<3x128xf32>
    %158 = arith.select %156, %143, %157 : vector<3x128xi1>, vector<3x128xf32>
    %cst_57 = arith.constant dense<0.000000e+00> : vector<3xf32>
    %159 = vector.multi_reduction <add>, %158, %cst_57 [1] : vector<3x128xf32> to vector<3xf32>
    %160 = vector.shape_cast %159 : vector<3xf32> to vector<3x1xf32>
    %161 = arith.subf %153, %160 : vector<3x1xf32>
    %cst_58 = arith.constant dense<0.000000e+00> : vector<1xf32>
    %162 = vector.multi_reduction <add>, %161, %cst_58 [0] : vector<3x1xf32> to vector<1xf32>
    %163 = vector.shape_cast %162 : vector<1xf32> to vector<1x1xf32>
    %cst_59 = arith.constant 3.000000e+00 : f32
    %164 = vector.broadcast %cst_59 : f32 to vector<1x1xf32>
    %165 = arith.divf %163, %164 : vector<1x1xf32>
    %c0_60 = arith.constant 0 : index
    %c0_61 = arith.constant 0 : index
    %166 = vector.load %arg18[%c0_60, %c0_61] : memref<1x1xf32, #tpu.memory_space<vmem>>, vector<1x1xf32>
    tpu.vector_store %arg18[%c0_60, %c0_61], %165 {strides = array<i32>} : memref<1x1xf32, #tpu.memory_space<vmem>>, vector<1x1xf32>,
    return
  }
}

</mosaic_0001>

<llo_original>
// kernel: _typing_forward.1
$region0: #{_typing_forward.1}
  #allocation0 [shape = 'u32[]', space=smem, size = 0x4, offset = 0x4, fixed_abs, tag = 'smem constant byte address 0x4 - core index']
  #allocation1 [shape = 'u32[144,128]{1,0:T(1,128)}', space=vmem, size = 0x12000, scoped, tag = 'internal scratch']
  %s0 = inlined_call_operand.vmem [shape: s32[24,1], index: 0, kind: input, shape index: {}]
  %s1 = inlined_call_operand.vmem [shape: f32[64,32], index: 1, kind: input, shape index: {}]
  %s2 = inlined_call_operand.vmem [shape: f32[32,32], index: 2, kind: input, shape index: {}]
  %s3 = inlined_call_operand.vmem [shape: f32[1,32], index: 3, kind: input, shape index: {}]
  %s4 = inlined_call_operand.vmem [shape: s32[30,1], index: 4, kind: input, shape index: {}]
  %s5 = inlined_call_operand.vmem [shape: f32[30,1], index: 5, kind: input, shape index: {}]
  %s6 = inlined_call_operand.vmem [shape: f32[32,16], index: 6, kind: input, shape index: {}]
  %s7 = inlined_call_operand.vmem [shape: f32[32,16], index: 7, kind: input, shape index: {}]
  %s8 = inlined_call_operand.vmem [shape: f32[1,16], index: 8, kind: input, shape index: {}]
  %s9 = inlined_call_operand.vmem [shape: f32[32,16], index: 9, kind: input, shape index: {}]
  %s10 = inlined_call_operand.vmem [shape: f32[32,16], index: 10, kind: input, shape index: {}]
  %s11 = inlined_call_operand.vmem [shape: f32[32,16], index: 11, kind: input, shape index: {}]
  %s12 = inlined_call_operand.vmem [shape: f32[1,16], index: 12, kind: input, shape index: {}]
  %s13 = inlined_call_operand.vmem [shape: f32[32,32], index: 13, kind: input, shape index: {}]
  %s14 = inlined_call_operand.vmem [shape: f32[1,32], index: 14, kind: input, shape index: {}]
  %s15 = inlined_call_operand.vmem [shape: f32[32,128], index: 15, kind: input, shape index: {}]
  %s16 = inlined_call_operand.vmem [shape: f32[1,128], index: 16, kind: input, shape index: {}]
  %s17 = inlined_call_operand.vmem [shape: s32[3,1], index: 17, kind: input, shape index: {}]
  %s18 = inlined_call_operand.hbm [shape: f32[1,1], index: 18, kind: output, shape index: {}]
  %s19 = sld [smem:[#allocation0]]
  $region82: #{_typing_forward.1} parent=0
    _
  %s21 = ssub.s32 1, %s19
  %s22 = scalar_select 0, %s21, %s19
  $region1: #{_typing_forward.1} parent=0
    #allocation2 [shape = 'u8[512]{0}', space=vmem, size = 0x400, scoped, tag = 'output window, operand 0, single buffered']
    #allocation3 [shape = 's32[1]{0}', space=sflag, size = 0x4, scoped, tag = 'scoped memory for _typing_forward.1']
    %23 = vsyncpa [#allocation3], 0
    // Predicated region
    $region2: #{_typing_forward.1} parent=1 // pred_check
      _
    $region3: #{_typing_forward.1} parent=1 // pred_check_branch
      %25 = sbr.rel (0) target = $region5
    $region4: #{_typing_forward.1} parent=1 // pred_region
      _
    $region5: #{_typing_forward.1} parent=1 // pred_fallthru
      _
    // Predicated region
    $region6: #{_typing_forward.1} parent=1 // pred_check
      _
    $region7: #{_typing_forward.1} parent=1 // pred_check_branch
      %27 = sbr.rel (0) target = $region9
    $region8: #{_typing_forward.1} parent=1 // pred_region
      _
    $region9: #{_typing_forward.1} parent=1 // pred_fallthru
      _
    // Predicated region
    $region10: #{_typing_forward.1} parent=1 // pred_check
      _
    $region11: #{_typing_forward.1} parent=1 // pred_check_branch
      %29 = sbr.rel (0) target = $region13
    $region12: #{_typing_forward.1} parent=1 // pred_region
      _
    $region13: #{_typing_forward.1} parent=1 // pred_fallthru
      _
    // Predicated region
    $region14: #{_typing_forward.1} parent=1 // pred_check
      _
    $region15: #{_typing_forward.1} parent=1 // pred_check_branch
      %31 = sbr.rel (0) target = $region17
    $region16: #{_typing_forward.1} parent=1 // pred_region
      _
    $region17: #{_typing_forward.1} parent=1 // pred_fallthru
      _
    // Predicated region
    $region18: #{_typing_forward.1} parent=1 // pred_check
      _
    $region19: #{_typing_forward.1} parent=1 // pred_check_branch
      %33 = sbr.rel (0) target = $region21
    $region20: #{_typing_forward.1} parent=1 // pred_region
      _
    $region21: #{_typing_forward.1} parent=1 // pred_fallthru
      _
    // Predicated region
    $region22: #{_typing_forward.1} parent=1 // pred_check
      _
    $region23: #{_typing_forward.1} parent=1 // pred_check_branch
      %35 = sbr.rel (0) target = $region25
    $region24: #{_typing_forward.1} parent=1 // pred_region
      _
    $region25: #{_typing_forward.1} parent=1 // pred_fallthru
      _
    // Predicated region
    $region26: #{_typing_forward.1} parent=1 // pred_check
      _
    $region27: #{_typing_forward.1} parent=1 // pred_check_branch
      %37 = sbr.rel (0) target = $region29
    $region28: #{_typing_forward.1} parent=1 // pred_region
      _
    $region29: #{_typing_forward.1} parent=1 // pred_fallthru
      _
    // Predicated region
    $region30: #{_typing_forward.1} parent=1 // pred_check
      _
    $region31: #{_typing_forward.1} parent=1 // pred_check_branch
      %39 = sbr.rel (0) target = $region33
    $region32: #{_typing_forward.1} parent=1 // pred_region
      _
    $region33: #{_typing_forward.1} parent=1 // pred_fallthru
      _
    // Predicated region
    $region34: #{_typing_forward.1} parent=1 // pred_check
      _
    $region35: #{_typing_forward.1} parent=1 // pred_check_branch
      %41 = sbr.rel (0) target = $region37
    $region36: #{_typing_forward.1} parent=1 // pred_region
      _
    $region37: #{_typing_forward.1} parent=1 // pred_fallthru
      _
    // Predicated region
    $region38: #{_typing_forward.1} parent=1 // pred_check
      _
    $region39: #{_typing_forward.1} parent=1 // pred_check_branch
      %43 = sbr.rel (0) target = $region41
    $region40: #{_typing_forward.1} parent=1 // pred_region
      _
    $region41: #{_typing_forward.1} parent=1 // pred_fallthru
      _
    // Predicated region
    $region42: #{_typing_forward.1} parent=1 // pred_check
      _
    $region43: #{_typing_forward.1} parent=1 // pred_check_branch
      %45 = sbr.rel (0) target = $region45
    $region44: #{_typing_forward.1} parent=1 // pred_region
      _
    $region45: #{_typing_forward.1} parent=1 // pred_fallthru
      _
    // Predicated region
    $region46: #{_typing_forward.1} parent=1 // pred_check
      _
    $region47: #{_typing_forward.1} parent=1 // pred_check_branch
      %47 = sbr.rel (0) target = $region49
    $region48: #{_typing_forward.1} parent=1 // pred_region
      _
    $region49: #{_typing_forward.1} parent=1 // pred_fallthru
      _
    // Predicated region
    $region50: #{_typing_forward.1} parent=1 // pred_check
      _
    $region51: #{_typing_forward.1} parent=1 // pred_check_branch
      %49 = sbr.rel (0) target = $region53
    $region52: #{_typing_forward.1} parent=1 // pred_region
      _
    $region53: #{_typing_forward.1} parent=1 // pred_fallthru
      _
    // Predicated region
    $region54: #{_typing_forward.1} parent=1 // pred_check
      _
    $region55: #{_typing_forward.1} parent=1 // pred_check_branch
      %51 = sbr.rel (0) target = $region57
    $region56: #{_typing_forward.1} parent=1 // pred_region
      _
    $region57: #{_typing_forward.1} parent=1 // pred_fallthru
      _
    // Predicated region
    $region58: #{_typing_forward.1} parent=1 // pred_check
      _
    $region59: #{_typing_forward.1} parent=1 // pred_check_branch
      %53 = sbr.rel (0) target = $region61
    $region60: #{_typing_forward.1} parent=1 // pred_region
      _
    $region61: #{_typing_forward.1} parent=1 // pred_fallthru
      _
    // Predicated region
    $region62: #{_typing_forward.1} parent=1 // pred_check
      _
    $region63: #{_typing_forward.1} parent=1 // pred_check_branch
      %55 = sbr.rel (0) target = $region65
    $region64: #{_typing_forward.1} parent=1 // pred_region
      _
    $region65: #{_typing_forward.1} parent=1 // pred_fallthru
      _
    // Predicated region
    $region66: #{_typing_forward.1} parent=1 // pred_check
      _
    $region67: #{_typing_forward.1} parent=1 // pred_check_branch
      %57 = sbr.rel (0) target = $region69
    $region68: #{_typing_forward.1} parent=1 // pred_region
      _
    $region69: #{_typing_forward.1} parent=1 // pred_fallthru
      _
    // Predicated region
    $region70: #{_typing_forward.1} parent=1 // pred_check
      _
    $region71: #{_typing_forward.1} parent=1 // pred_check_branch
      %59 = sbr.rel (0) target = $region73
    $region72: #{_typing_forward.1} parent=1 // pred_region
      _
    $region73: #{_typing_forward.1} parent=1 // pred_fallthru
      _
    %v60 = vld [vmem:[%s0] sm:$0xff]
    %v61 = vld [vmem:[%s0 + $0x8] sm:$0xff]
    %v62 = vld [vmem:[%s0 + $0x10] sm:$0xff]
    %v63 = vld [vmem:[%s1] sm:$0xff]
    %v64 = vld [vmem:[%s1 + $0x8] sm:$0xff]
    %v65 = vld [vmem:[%s1 + $0x10] sm:$0xff]
    %v66 = vld [vmem:[%s1 + $0x18] sm:$0xff]
    %v67 = vld [vmem:[%s1 + $0x20] sm:$0xff]
    %v68 = vld [vmem:[%s1 + $0x28] sm:$0xff]
    %v69 = vld [vmem:[%s1 + $0x30] sm:$0xff]
    %v70 = vld [vmem:[%s1 + $0x38] sm:$0xff]
    %v71 = vld [vmem:[%s2] sm:$0xff]
    %v72 = vld [vmem:[%s2 + $0x8] sm:$0xff]
    %v73 = vld [vmem:[%s2 + $0x10] sm:$0xff]
    %v74 = vld [vmem:[%s2 + $0x18] sm:$0xff]
    %v75 = vld [vmem:[%s3] sm:$0x1]
    %v76 = vlaneseq
    %v77 = vand.u32 %v76, 127
    %78 = vset.pattern.permute.xlu0 0
    %79 = vperm.xlu0 %78, %v60
    %v80 = vpop.permute.xlu0 %79
    %81 = vset.pattern.permute.xlu0 0
    %82 = vperm.xlu0 %81, %v61
    %v83 = vpop.permute.xlu0 %82
    %84 = vset.pattern.permute.xlu0 0
    %85 = vperm.xlu0 %84, %v62
    %v86 = vpop.permute.xlu0 %85
    %vm87 = vcmp.eq.s32.totalorder %v77, %v80
    %vm88 = vcmp.eq.s32.totalorder %v77, %v83
    %vm89 = vcmp.eq.s32.totalorder %v77, %v86
    %v90 = vsel %vm87, 1, 0
    %v91 = vsel %vm88, 1, 0
    %v92 = vsel %vm89, 1, 0
    %v93 = vcvt.s32.f32 %v90
    %v94 = vcvt.s32.f32 %v91
    %v95 = vcvt.s32.f32 %v92
    %vm96 = vcmask 523264
    %v98 = vsel %vm96, %v93, 0
    %v101 = vsel %vm96, %v94, 0
    %v104 = vsel %vm96, %v95, 0
    %106 = vmatprep.subr.mxu0 0.0
    %107 = vmatpush1.msra.mxu0 %v63
    %108 = vmatprep.subr.mxu0 0.0
    %109 = vmatpush1.msra.mxu0 %v64
    %110 = vmatprep.subr.mxu0 0.0
    %111 = vmatpush1.msra.mxu0 %v65
    %112 = vmatprep.subr.mxu0 0.0
    %113 = vmatpush1.msra.mxu0 %v66
    %114 = vmatprep.subr.mxu0 0.0
    %115 = vmatpush1.msra.mxu0 %v67
    %116 = vmatprep.subr.mxu0 0.0
    %117 = vmatpush1.msra.mxu0 %v68
    %118 = vmatprep.subr.mxu0 0.0
    %119 = vmatpush1.msra.mxu0 %v69
    %120 = vmatprep.subr.mxu0 0.0
    %121 = vmatpush1.msra.mxu0 %v70
    %122 = vmatprep.subr.mxu0 0.0
    %123 = vmatpush1.msra.mxu0 0.0
    %124 = vmatprep.subr.mxu0 0.0
    %125 = vmatpush1.msra.mxu0 0.0
    %126 = vmatprep.subr.mxu0 0.0
    %127 = vmatpush1.msra.mxu0 0.0
    %128 = vmatprep.subr.mxu0 0.0
    %129 = vmatpush1.msra.mxu0 0.0
    %130 = vmatprep.subr.mxu0 0.0
    %131 = vmatpush1.msra.mxu0 0.0
    %132 = vmatprep.subr.mxu0 0.0
    %133 = vmatpush1.msra.mxu0 0.0
    %134 = vmatprep.subr.mxu0 0.0
    %135 = vmatpush1.msra.mxu0 0.0
    %136 = vmatprep.subr.mxu0 0.0
    %137 = vmatpush1.msra.mxu0 0.0
    %138 = vmatprep.subr.mxu0 0.0
    %139 = vmatpush1.msra.mxu0 0.0
    %140 = vmatprep.subr.mxu0 0.0
    %141 = vmatpush1.msra.mxu0 0.0
    %142 = vmatprep.subr.mxu0 0.0
    %143 = vmatpush1.msra.mxu0 0.0
    %144 = vmatprep.subr.mxu0 0.0
    %145 = vmatpush1.msra.mxu0 0.0
    %146 = vmatprep.subr.mxu0 0.0
    %147 = vmatpush1.msra.mxu0 0.0
    %148 = vmatprep.subr.mxu0 0.0
    %149 = vmatpush1.msra.mxu0 0.0
    %150 = vmatprep.subr.mxu0 0.0
    %151 = vmatpush1.msra.mxu0 0.0
    %152 = vmatprep.subr.mxu0 0.0
    %153 = vmatpush1.msra.mxu0 0.0
    %154 = vmatprep.subr.mxu0 0.0
    %155 = vmatpush1.msra.mxu0 0.0
    %156 = vmatprep.subr.mxu0 0.0
    %157 = vmatpush1.msra.mxu0 0.0
    %158 = vmatprep.subr.mxu0 0.0
    %159 = vmatpush1.msra.mxu0 0.0
    %160 = vmatprep.subr.mxu0 0.0
    %161 = vmatpush1.msra.mxu0 0.0
    %162 = vmatprep.subr.mxu0 0.0
    %163 = vmatpush1.msra.mxu0 0.0
    %164 = vmatprep.subr.mxu0 0.0
    %165 = vmatpush1.msra.mxu0 0.0
    %166 = vmatprep.subr.mxu0 0.0
    %167 = vmatpush1.msra.mxu0 0.0
    %168 = vmatprep.subr.mxu0 0.0
    %169 = vmatpush1.msra.mxu0 0.0
    %170 = vmatprep.mubr.f32.mxu0 0.0
    %171 = vmatmul.mubr.f32.gmra.mrb[0].mxu0 %v98
    %v172 = vpop.f32.mrb[0].mxu0
    %v173 = vadd.f32 0.0, %v172
    %v174 = vpop.f32.mrb[0].mxu0
    %175 = vmatprep.mubr.f32.mxu0 0.0
    %176 = vmatmul.mubr.f32.gmra.mrb[0].mxu0 %v101
    %v177 = vpop.f32.mrb[0].mxu0
    %v178 = vadd.f32 0.0, %v177
    %v179 = vpop.f32.mrb[0].mxu0
    %180 = vmatprep.mubr.f32.mxu0 0.0
    %181 = vmatmul.mubr.f32.gmra.mrb[0].mxu0 %v104
    %v182 = vpop.f32.mrb[0].mxu0
    %v183 = vadd.f32 0.0, %v182
    %v184 = vpop.f32.mrb[0].mxu0
    %185 = vdwg.mxu0
    %v187 = vlaneseq
    %v188 = vshrl.u32 %v187, 7
    %v189 = vsub.s32 0, %v188
    %v190 = vrot.slane %v75, %v189
    %vm192 = vcmask 261120
    %v194 = vsel %vm192, %v173, 0
    %v197 = vsel %vm192, %v178, 0
    %v200 = vsel %vm192, %v183, 0
    %202 = vmatprep.subr.mxu0 0.0
    %203 = vmatpush1.msra.mxu0 %v71
    %204 = vmatprep.subr.mxu0 0.0
    %205 = vmatpush1.msra.mxu0 %v72
    %206 = vmatprep.subr.mxu0 0.0
    %207 = vmatpush1.msra.mxu0 %v73
    %208 = vmatprep.subr.mxu0 0.0
    %209 = vmatpush1.msra.mxu0 %v74
    %210 = vmatprep.subr.mxu0 0.0
    %211 = vmatpush1.msra.mxu0 0.0
    %212 = vmatprep.subr.mxu0 0.0
    %213 = vmatpush1.msra.mxu0 0.0
    %214 = vmatprep.subr.mxu0 0.0
    %215 = vmatpush1.msra.mxu0 0.0
    %216 = vmatprep.subr.mxu0 0.0
    %217 = vmatpush1.msra.mxu0 0.0
    %218 = vmatprep.subr.mxu0 0.0
    %219 = vmatpush1.msra.mxu0 0.0
    %220 = vmatprep.subr.mxu0 0.0
    %221 = vmatpush1.msra.mxu0 0.0
    %222 = vmatprep.subr.mxu0 0.0
    %223 = vmatpush1.msra.mxu0 0.0
    %224 = vmatprep.subr.mxu0 0.0
    %225 = vmatpush1.msra.mxu0 0.0
    %226 = vmatprep.subr.mxu0 0.0
    %227 = vmatpush1.msra.mxu0 0.0
    %228 = vmatprep.subr.mxu0 0.0
    %229 = vmatpush1.msra.mxu0 0.0
    %230 = vmatprep.subr.mxu0 0.0
    %231 = vmatpush1.msra.mxu0 0.0
    %232 = vmatprep.subr.mxu0 0.0
    %233 = vmatpush1.msra.mxu0 0.0
    %234 = vmatprep.subr.mxu0 0.0
    %235 = vmatpush1.msra.mxu0 0.0
    %236 = vmatprep.subr.mxu0 0.0
    %237 = vmatpush1.msra.mxu0 0.0
    %238 = vmatprep.subr.mxu0 0.0
    %239 = vmatpush1.msra.mxu0 0.0
    %240 = vmatprep.subr.mxu0 0.0
    %241 = vmatpush1.msra.mxu0 0.0
    %242 = vmatprep.subr.mxu0 0.0
    %243 = vmatpush1.msra.mxu0 0.0
    %244 = vmatprep.subr.mxu0 0.0
    %245 = vmatpush1.msra.mxu0 0.0
    %246 = vmatprep.subr.mxu0 0.0
    %247 = vmatpush1.msra.mxu0 0.0
    %248 = vmatprep.subr.mxu0 0.0
    %249 = vmatpush1.msra.mxu0 0.0
    %250 = vmatprep.subr.mxu0 0.0
    %251 = vmatpush1.msra.mxu0 0.0
    %252 = vmatprep.subr.mxu0 0.0
    %253 = vmatpush1.msra.mxu0 0.0
    %254 = vmatprep.subr.mxu0 0.0
    %255 = vmatpush1.msra.mxu0 0.0
    %256 = vmatprep.subr.mxu0 0.0
    %257 = vmatpush1.msra.mxu0 0.0
    %258 = vmatprep.subr.mxu0 0.0
    %259 = vmatpush1.msra.mxu0 0.0
    %260 = vmatprep.subr.mxu0 0.0
    %261 = vmatpush1.msra.mxu0 0.0
    %262 = vmatprep.subr.mxu0 0.0
    %263 = vmatpush1.msra.mxu0 0.0
    %264 = vmatprep.subr.mxu0 0.0
    %265 = vmatpush1.msra.mxu0 0.0
    %266 = vmatprep.mubr.f32.mxu0 0.0
    %267 = vmatmul.mubr.f32.gmra.mrb[0].mxu0 %v194
    %v268 = vpop.f32.mrb[0].mxu0
    %v269 = vadd.f32 %v190, %v268
    %v270 = vpop.f32.mrb[0].mxu0
    %271 = vmatprep.mubr.f32.mxu0 0.0
    %272 = vmatmul.mubr.f32.gmra.mrb[0].mxu0 %v197
    %v273 = vpop.f32.mrb[0].mxu0
    %v274 = vadd.f32 %v190, %v273
    %v275 = vpop.f32.mrb[0].mxu0
    %276 = vmatprep.mubr.f32.mxu0 0.0
    %277 = vmatmul.mubr.f32.gmra.mrb[0].mxu0 %v200
    %v278 = vpop.f32.mrb[0].mxu0
    %v279 = vadd.f32 %v190, %v278
    %v280 = vpop.f32.mrb[0].mxu0
    %281 = vdwg.mxu0
    %v282 = vmul.f32 %v269, 0.5
    %v283 = vmul.f32 %v274, 0.5
    %v284 = vmul.f32 %v279, 0.5
    %v285 = vmul.f32 %v269, 0.044715
    %v286 = vmul.f32 %v274, 0.044715
    %v287 = vmul.f32 %v279, 0.044715
    %v288 = vmul.f32 %v285, %v269
    %v289 = vmul.f32 %v286, %v274
    %v290 = vmul.f32 %v287, %v279
    %v291 = vmul.f32 %v288, %v269
    %v292 = vmul.f32 %v289, %v274
    %v293 = vmul.f32 %v290, %v279
    %v294 = vadd.f32 %v269, %v291
    %v295 = vadd.f32 %v274, %v292
    %v296 = vadd.f32 %v279, %v293
    %v297 = vmul.f32 %v294, 0.7978846
    %v298 = vmul.f32 %v295, 0.7978846
    %v299 = vmul.f32 %v296, 0.7978846
    %v300 = vtanh.pop %v297
    %v301 = vtanh.pop %v298
    %v302 = vtanh.pop %v299
    %v303 = vadd.f32 %v300, 1.0
    %v304 = vadd.f32 %v301, 1.0
    %v305 = vadd.f32 %v302, 1.0
    %v306 = vmul.f32 %v282, %v303
    %v307 = vmul.f32 %v283, %v304
    %v308 = vmul.f32 %v284, %v305
    %v309 = vld [vmem:[%s4] sm:$0xff]
    %v310 = vld [vmem:[%s4 + $0x8] sm:$0xff]
    %v311 = vld [vmem:[%s4 + $0x10] sm:$0xff]
    %v312 = vld [vmem:[%s4 + $0x18] sm:$0x3f]
    %313 = vset.pattern.permute.xlu0 0
    %314 = vperm.xlu0 %313, %v309
    %v315 = vpop.permute.xlu0 %314
    %316 = vset.pattern.permute.xlu0 0
    %317 = vperm.xlu0 %316, %v310
    %v318 = vpop.permute.xlu0 %317
    %319 = vset.pattern.permute.xlu0 0
    %320 = vperm.xlu0 %319, %v311
    %v321 = vpop.permute.xlu0 %320
    %322 = vset.pattern.permute.xlu0 0
    %323 = vperm.xlu0 %322, %v312
    %v324 = vpop.permute.xlu0 %323
    %vm325 = vcmp.eq.s32.totalorder %v77, %v315
    %vm326 = vcmp.eq.s32.totalorder %v77, %v318
    %vm327 = vcmp.eq.s32.totalorder %v77, %v321
    %vm328 = vcmp.eq.s32.totalorder %v77, %v324
    %v329 = vsel %vm325, 1, 0
    %v330 = vsel %vm326, 1, 0
    %v331 = vsel %vm327, 1, 0
    %v332 = vsel %vm328, 1, 0
    %v333 = vcvt.s32.f32 %v329
    %v334 = vcvt.s32.f32 %v330
    %v335 = vcvt.s32.f32 %v331
    %v336 = vcvt.s32.f32 %v332
    %vm337 = vcmask 195584
    %v339 = vsel %vm337, %v333, 0
    %v342 = vsel %vm337, %v334, 0
    %v345 = vsel %vm337, %v335, 0
    %v348 = vsel %vm337, %v336, 0
    %350 = vmatprep.subr.mxu0 0.0
    %351 = vmatpush1.msra.mxu0 %v306
    %352 = vmatprep.subr.mxu0 0.0
    %353 = vmatpush1.msra.mxu0 %v307
    %354 = vmatprep.subr.mxu0 0.0
    %355 = vmatpush1.msra.mxu0 %v308
    %356 = vmatprep.subr.mxu0 0.0
    %357 = vmatpush1.msra.mxu0 0.0
    %358 = vmatprep.subr.mxu0 0.0
    %359 = vmatpush1.msra.mxu0 0.0
    %360 = vmatprep.subr.mxu0 0.0
    %361 = vmatpush1.msra.mxu0 0.0
    %362 = vmatprep.subr.mxu0 0.0
    %363 = vmatpush1.msra.mxu0 0.0
    %364 = vmatprep.subr.mxu0 0.0
    %365 = vmatpush1.msra.mxu0 0.0
    %366 = vmatprep.subr.mxu0 0.0
    %367 = vmatpush1.msra.mxu0 0.0
    %368 = vmatprep.subr.mxu0 0.0
    %369 = vmatpush1.msra.mxu0 0.0
    %370 = vmatprep.subr.mxu0 0.0
    %371 = vmatpush1.msra.mxu0 0.0
    %372 = vmatprep.subr.mxu0 0.0
    %373 = vmatpush1.msra.mxu0 0.0
    %374 = vmatprep.subr.mxu0 0.0
    %375 = vmatpush1.msra.mxu0 0.0
    %376 = vmatprep.subr.mxu0 0.0
    %377 = vmatpush1.msra.mxu0 0.0
    %378 = vmatprep.subr.mxu0 0.0
    %379 = vmatpush1.msra.mxu0 0.0
    %380 = vmatprep.subr.mxu0 0.0
    %381 = vmatpush1.msra.mxu0 0.0
    %382 = vmatprep.subr.mxu0 0.0
    %383 = vmatpush1.msra.mxu0 0.0
    %384 = vmatprep.subr.mxu0 0.0
    %385 = vmatpush1.msra.mxu0 0.0
    %386 = vmatprep.subr.mxu0 0.0
    %387 = vmatpush1.msra.mxu0 0.0
    %388 = vmatprep.subr.mxu0 0.0
    %389 = vmatpush1.msra.mxu0 0.0
    %390 = vmatprep.subr.mxu0 0.0
    %391 = vmatpush1.msra.mxu0 0.0
    %392 = vmatprep.subr.mxu0 0.0
    %393 = vmatpush1.msra.mxu0 0.0
    %394 = vmatprep.subr.mxu0 0.0
    %395 = vmatpush1.msra.mxu0 0.0
    %396 = vmatprep.subr.mxu0 0.0
    %397 = vmatpush1.msra.mxu0 0.0
    %398 = vmatprep.subr.mxu0 0.0
    %399 = vmatpush1.msra.mxu0 0.0
    %400 = vmatprep.subr.mxu0 0.0
    %401 = vmatpush1.msra.mxu0 0.0
    %402 = vmatprep.subr.mxu0 0.0
    %403 = vmatpush1.msra.mxu0 0.0
    %404 = vmatprep.subr.mxu0 0.0
    %405 = vmatpush1.msra.mxu0 0.0
    %406 = vmatprep.subr.mxu0 0.0
    %407 = vmatpush1.msra.mxu0 0.0
    %408 = vmatprep.subr.mxu0 0.0
    %409 = vmatpush1.msra.mxu0 0.0
    %410 = vmatprep.subr.mxu0 0.0
    %411 = vmatpush1.msra.mxu0 0.0
    %412 = vmatprep.subr.mxu0 0.0
    %413 = vmatpush1.msra.mxu0 0.0
    %414 = vmatprep.mubr.f32.mxu0 0.0
    %415 = vmatmul.mubr.f32.gmra.mrb[0].mxu0 %v339
    %v416 = vpop.f32.mrb[0].mxu0
    %v417 = vadd.f32 0.0, %v416
    %v418 = vpop.f32.mrb[0].mxu0
    %419 = vmatprep.mubr.f32.mxu0 0.0
    %420 = vmatmul.mubr.f32.gmra.mrb[0].mxu0 %v342
    %v421 = vpop.f32.mrb[0].mxu0
    %v422 = vadd.f32 0.0, %v421
    %v423 = vpop.f32.mrb[0].mxu0
    %424 = vmatprep.mubr.f32.mxu0 0.0
    %425 = vmatmul.mubr.f32.gmra.mrb[0].mxu0 %v345
    %v426 = vpop.f32.mrb[0].mxu0
    %v427 = vadd.f32 0.0, %v426
    %v428 = vpop.f32.mrb[0].mxu0
    %429 = vmatprep.mubr.f32.mxu0 0.0
    %430 = vmatmul.mubr.f32.gmra.mrb[0].mxu0 %v348
    %v431 = vpop.f32.mrb[0].mxu0
    %v432 = vadd.f32 0.0, %v431
    %v433 = vpop.f32.mrb[0].mxu0
    %434 = vdwg.mxu0
    %v435 = vld [vmem:[%s5] sm:$0xff]
    %v436 = vld [vmem:[%s5 + $0x8] sm:$0xff]
    %v437 = vld [vmem:[%s5 + $0x10] sm:$0xff]
    %v438 = vld [vmem:[%s5 + $0x18] sm:$0x3f]
    %440 = vset.pattern.permute.xlu0 0
    %441 = vperm.xlu0 %440, %v435
    %v442 = vpop.permute.xlu0 %441
    %445 = vset.pattern.permute.xlu0 0
    %446 = vperm.xlu0 %445, %v436
    %v447 = vpop.permute.xlu0 %446
    %450 = vset.pattern.permute.xlu0 0
    %451 = vperm.xlu0 %450, %v437
    %v452 = vpop.permute.xlu0 %451
    %455 = vset.pattern.permute.xlu0 0
    %456 = vperm.xlu0 %455, %v438
    %v457 = vpop.permute.xlu0 %456
    %v459 = vmul.f32 %v417, %v442
    %v460 = vmul.f32 %v422, %v447
    %v461 = vmul.f32 %v427, %v452
    %v462 = vmul.f32 %v432, %v457
    %v463 = vld [vmem:[%s6] sm:$0xff]
    %v464 = vld [vmem:[%s6 + $0x8] sm:$0xff]
    %v465 = vld [vmem:[%s6 + $0x10] sm:$0xff]
    %v466 = vld [vmem:[%s6 + $0x18] sm:$0xff]
    %v468 = vsel %vm192, %v459, 0
    %v471 = vsel %vm192, %v460, 0
    %v474 = vsel %vm192, %v461, 0
    %v477 = vsel %vm192, %v462, 0
    %479 = vmatprep.subr.mxu0 0.0
    %480 = vmatpush1.msra.mxu0 %v463
    %481 = vmatprep.subr.mxu0 0.0
    %482 = vmatpush1.msra.mxu0 %v464
    %483 = vmatprep.subr.mxu0 0.0
    %484 = vmatpush1.msra.mxu0 %v465
    %485 = vmatprep.subr.mxu0 0.0
    %486 = vmatpush1.msra.mxu0 %v466
    %487 = vmatprep.subr.mxu0 0.0
    %488 = vmatpush1.msra.mxu0 0.0
    %489 = vmatprep.subr.mxu0 0.0
    %490 = vmatpush1.msra.mxu0 0.0
    %491 = vmatprep.subr.mxu0 0.0
    %492 = vmatpush1.msra.mxu0 0.0
    %493 = vmatprep.subr.mxu0 0.0
    %494 = vmatpush1.msra.mxu0 0.0
    %495 = vmatprep.subr.mxu0 0.0
    %496 = vmatpush1.msra.mxu0 0.0
    %497 = vmatprep.subr.mxu0 0.0
    %498 = vmatpush1.msra.mxu0 0.0
    %499 = vmatprep.subr.mxu0 0.0
    %500 = vmatpush1.msra.mxu0 0.0
    %501 = vmatprep.subr.mxu0 0.0
    %502 = vmatpush1.msra.mxu0 0.0
    %503 = vmatprep.subr.mxu0 0.0
    %504 = vmatpush1.msra.mxu0 0.0
    %505 = vmatprep.subr.mxu0 0.0
    %506 = vmatpush1.msra.mxu0 0.0
    %507 = vmatprep.subr.mxu0 0.0
    %508 = vmatpush1.msra.mxu0 0.0
    %509 = vmatprep.subr.mxu0 0.0
    %510 = vmatpush1.msra.mxu0 0.0
    %511 = vmatprep.subr.mxu0 0.0
    %512 = vmatpush1.msra.mxu0 0.0
    %513 = vmatprep.subr.mxu0 0.0
    %514 = vmatpush1.msra.mxu0 0.0
    %515 = vmatprep.subr.mxu0 0.0
    %516 = vmatpush1.msra.mxu0 0.0
    %517 = vmatprep.subr.mxu0 0.0
    %518 = vmatpush1.msra.mxu0 0.0
    %519 = vmatprep.subr.mxu0 0.0
    %520 = vmatpush1.msra.mxu0 0.0
    %521 = vmatprep.subr.mxu0 0.0
    %522 = vmatpush1.msra.mxu0 0.0
    %523 = vmatprep.subr.mxu0 0.0
    %524 = vmatpush1.msra.mxu0 0.0
    %525 = vmatprep.subr.mxu0 0.0
    %526 = vmatpush1.msra.mxu0 0.0
    %527 = vmatprep.subr.mxu0 0.0
    %528 = vmatpush1.msra.mxu0 0.0
    %529 = vmatprep.subr.mxu0 0.0
    %530 = vmatpush1.msra.mxu0 0.0
    %531 = vmatprep.subr.mxu0 0.0
    %532 = vmatpush1.msra.mxu0 0.0
    %533 = vmatprep.subr.mxu0 0.0
    %534 = vmatpush1.msra.mxu0 0.0
    %535 = vmatprep.subr.mxu0 0.0
    %536 = vmatpush1.msra.mxu0 0.0
    %537 = vmatprep.subr.mxu0 0.0
    %538 = vmatpush1.msra.mxu0 0.0
    %539 = vmatprep.subr.mxu0 0.0
    %540 = vmatpush1.msra.mxu0 0.0
    %541 = vmatprep.subr.mxu0 0.0
    %542 = vmatpush1.msra.mxu0 0.0
    %543 = vmatprep.mubr.f32.mxu0 0.0
    %544 = vmatmul.mubr.f32.gmra.mrb[0].mxu0 %v468
    %v545 = vpop.f32.mrb[0].mxu0
    %v546 = vadd.f32 0.0, %v545
    %v547 = vpop.f32.mrb[0].mxu0
    %548 = vmatprep.mubr.f32.mxu0 0.0
    %549 = vmatmul.mubr.f32.gmra.mrb[0].mxu0 %v471
    %v550 = vpop.f32.mrb[0].mxu0
    %v551 = vadd.f32 0.0, %v550
    %v552 = vpop.f32.mrb[0].mxu0
    %553 = vmatprep.mubr.f32.mxu0 0.0
    %554 = vmatmul.mubr.f32.gmra.mrb[0].mxu0 %v474
    %v555 = vpop.f32.mrb[0].mxu0
    %v556 = vadd.f32 0.0, %v555
    %v557 = vpop.f32.mrb[0].mxu0
    %558 = vmatprep.mubr.f32.mxu0 0.0
    %559 = vmatmul.mubr.f32.gmra.mrb[0].mxu0 %v477
    %v560 = vpop.f32.mrb[0].mxu0
    %v561 = vadd.f32 0.0, %v560
    %v562 = vpop.f32.mrb[0].mxu0
    %563 = vdwg.mxu0
    %v568 = vcombine.high %v546, %v546
    %v570 = vunpack.c.l.s4 1983009808
    %v571 = vunpack.c.0.s8 %v570
    %v572 = vlaneseq
    %v573 = vshrl.u32 %v572, 7
    %v574 = vsub.s32 %v571, %v573
    %v575 = vrot.slane %v546, %v574
    %v577 = vunpack.c.l.s4 1983009808
    %v578 = vunpack.c.0.s8 %v577
    %v579 = vlaneseq
    %v580 = vshrl.u32 %v579, 7
    %v581 = vsub.s32 %v578, %v580
    %v582 = vrot.slane %v568, %v581
    %v583 = vcombine.high %v575, %v575
    %v584 = vcombine.high %v582, %v582
    %v585 = vcombine.high %v551, %v551
    %v587 = vunpack.c.l.s4 1983009808
    %v588 = vunpack.c.0.s8 %v587
    %v589 = vlaneseq
    %v590 = vshrl.u32 %v589, 7
    %v591 = vsub.s32 %v588, %v590
    %v592 = vrot.slane %v551, %v591
    %v594 = vunpack.c.l.s4 1983009808
    %v595 = vunpack.c.0.s8 %v594
    %v596 = vlaneseq
    %v597 = vshrl.u32 %v596, 7
    %v598 = vsub.s32 %v595, %v597
    %v599 = vrot.slane %v585, %v598
    %v600 = vcombine.high %v592, %v592
    %v601 = vcombine.high %v599, %v599
    %v602 = vcombine.high %v556, %v556
    %v604 = vunpack.c.l.s4 1983009808
    %v605 = vunpack.c.0.s8 %v604
    %v606 = vlaneseq
    %v607 = vshrl.u32 %v606, 7
    %v608 = vsub.s32 %v605, %v607
    %v609 = vrot.slane %v556, %v608
    %v611 = vunpack.c.l.s4 1983009808
    %v612 = vunpack.c.0.s8 %v611
    %v613 = vlaneseq
    %v614 = vshrl.u32 %v613, 7
    %v615 = vsub.s32 %v612, %v614
    %v616 = vrot.slane %v602, %v615
    %v617 = vcombine.high %v609, %v609
    %v618 = vcombine.high %v616, %v616
    %v619 = vcombine.high %v561, %v561
    %v621 = vunpack.c.l.s4 1983009808
    %v622 = vunpack.c.0.s8 %v621
    %v623 = vlaneseq
    %v624 = vshrl.u32 %v623, 7
    %v625 = vsub.s32 %v622, %v624
    %v626 = vrot.slane %v561, %v625
    %v628 = vunpack.c.l.s4 1983009808
    %v629 = vunpack.c.0.s8 %v628
    %v630 = vlaneseq
    %v631 = vshrl.u32 %v630, 7
    %v632 = vsub.s32 %v629, %v631
    %v633 = vrot.slane %v619, %v632
    %v634 = vcombine.high %v626, %v626
    %v650 = vld [vmem:[%s7] sm:$0xff]
    %v651 = vld [vmem:[%s7 + $0x8] sm:$0xff]
    %v652 = vld [vmem:[%s7 + $0x10] sm:$0xff]
    %v653 = vld [vmem:[%s7 + $0x18] sm:$0xff]
    %654 = vmatprep.subr.mxu0 0.0
    %655 = vmatpush1.msra.mxu0 %v650
    %656 = vmatprep.subr.mxu0 0.0
    %657 = vmatpush1.msra.mxu0 %v651
    %658 = vmatprep.subr.mxu0 0.0
    %659 = vmatpush1.msra.mxu0 %v652
    %660 = vmatprep.subr.mxu0 0.0
    %661 = vmatpush1.msra.mxu0 %v653
    %662 = vmatprep.subr.mxu0 0.0
    %663 = vmatpush1.msra.mxu0 0.0
    %664 = vmatprep.subr.mxu0 0.0
    %665 = vmatpush1.msra.mxu0 0.0
    %666 = vmatprep.subr.mxu0 0.0
    %667 = vmatpush1.msra.mxu0 0.0
    %668 = vmatprep.subr.mxu0 0.0
    %669 = vmatpush1.msra.mxu0 0.0
    %670 = vmatprep.subr.mxu0 0.0
    %671 = vmatpush1.msra.mxu0 0.0
    %672 = vmatprep.subr.mxu0 0.0
    %673 = vmatpush1.msra.mxu0 0.0
    %674 = vmatprep.subr.mxu0 0.0
    %675 = vmatpush1.msra.mxu0 0.0
    %676 = vmatprep.subr.mxu0 0.0
    %677 = vmatpush1.msra.mxu0 0.0
    %678 = vmatprep.subr.mxu0 0.0
    %679 = vmatpush1.msra.mxu0 0.0
    %680 = vmatprep.subr.mxu0 0.0
    %681 = vmatpush1.msra.mxu0 0.0
    %682 = vmatprep.subr.mxu0 0.0
    %683 = vmatpush1.msra.mxu0 0.0
    %684 = vmatprep.subr.mxu0 0.0
    %685 = vmatpush1.msra.mxu0 0.0
    %686 = vmatprep.subr.mxu0 0.0
    %687 = vmatpush1.msra.mxu0 0.0
    %688 = vmatprep.subr.mxu0 0.0
    %689 = vmatpush1.msra.mxu0 0.0
    %690 = vmatprep.subr.mxu0 0.0
    %691 = vmatpush1.msra.mxu0 0.0
    %692 = vmatprep.subr.mxu0 0.0
    %693 = vmatpush1.msra.mxu0 0.0
    %694 = vmatprep.subr.mxu0 0.0
    %695 = vmatpush1.msra.mxu0 0.0
    %696 = vmatprep.subr.mxu0 0.0
    %697 = vmatpush1.msra.mxu0 0.0
    %698 = vmatprep.subr.mxu0 0.0
    %699 = vmatpush1.msra.mxu0 0.0
    %700 = vmatprep.subr.mxu0 0.0
    %701 = vmatpush1.msra.mxu0 0.0
    %702 = vmatprep.subr.mxu0 0.0
    %703 = vmatpush1.msra.mxu0 0.0
    %704 = vmatprep.subr.mxu0 0.0
    %705 = vmatpush1.msra.mxu0 0.0
    %706 = vmatprep.subr.mxu0 0.0
    %707 = vmatpush1.msra.mxu0 0.0
    %708 = vmatprep.subr.mxu0 0.0
    %709 = vmatpush1.msra.mxu0 0.0
    %710 = vmatprep.subr.mxu0 0.0
    %711 = vmatpush1.msra.mxu0 0.0
    %712 = vmatprep.subr.mxu0 0.0
    %713 = vmatpush1.msra.mxu0 0.0
    %714 = vmatprep.subr.mxu0 0.0
    %715 = vmatpush1.msra.mxu0 0.0
    %716 = vmatprep.subr.mxu0 0.0
    %717 = vmatpush1.msra.mxu0 0.0
    %718 = vmatprep.mubr.f32.mxu0 0.0
    %719 = vmatmul.mubr.f32.gmra.mrb[0].mxu0 %v468
    %v720 = vpop.f32.mrb[0].mxu0
    %v721 = vadd.f32 0.0, %v720
    %v722 = vpop.f32.mrb[0].mxu0
    %723 = vmatprep.mubr.f32.mxu0 0.0
    %724 = vmatmul.mubr.f32.gmra.mrb[0].mxu0 %v471
    %v725 = vpop.f32.mrb[0].mxu0
    %v726 = vadd.f32 0.0, %v725
    %v727 = vpop.f32.mrb[0].mxu0
    %728 = vmatprep.mubr.f32.mxu0 0.0
    %729 = vmatmul.mubr.f32.gmra.mrb[0].mxu0 %v474
    %v730 = vpop.f32.mrb[0].mxu0
    %v731 = vadd.f32 0.0, %v730
    %v732 = vpop.f32.mrb[0].mxu0
    %733 = vmatprep.mubr.f32.mxu0 0.0
    %734 = vmatmul.mubr.f32.gmra.mrb[0].mxu0 %v477
    %v735 = vpop.f32.mrb[0].mxu0
    %v736 = vadd.f32 0.0, %v735
    %v737 = vpop.f32.mrb[0].mxu0
    %738 = vdwg.mxu0
    %v743 = vcombine.high %v721, %v721
    %v745 = vunpack.c.l.s4 1983009808
    %v746 = vunpack.c.0.s8 %v745
    %v747 = vlaneseq
    %v748 = vshrl.u32 %v747, 7
    %v749 = vsub.s32 %v746, %v748
    %v750 = vrot.slane %v721, %v749
    %v752 = vunpack.c.l.s4 1983009808
    %v753 = vunpack.c.0.s8 %v752
    %v754 = vlaneseq
    %v755 = vshrl.u32 %v754, 7
    %v756 = vsub.s32 %v753, %v755
    %v757 = vrot.slane %v743, %v756
    %v758 = vcombine.high %v750, %v750
    %v759 = vcombine.high %v757, %v757
    %v760 = vcombine.high %v726, %v726
    %v762 = vunpack.c.l.s4 1983009808
    %v763 = vunpack.c.0.s8 %v762
    %v764 = vlaneseq
    %v765 = vshrl.u32 %v764, 7
    %v766 = vsub.s32 %v763, %v765
    %v767 = vrot.slane %v726, %v766
    %v769 = vunpack.c.l.s4 1983009808
    %v770 = vunpack.c.0.s8 %v769
    %v771 = vlaneseq
    %v772 = vshrl.u32 %v771, 7
    %v773 = vsub.s32 %v770, %v772
    %v774 = vrot.slane %v760, %v773
    %v775 = vcombine.high %v767, %v767
    %v776 = vcombine.high %v774, %v774
    %v777 = vcombine.high %v731, %v731
    %v779 = vunpack.c.l.s4 1983009808
    %v780 = vunpack.c.0.s8 %v779
    %v781 = vlaneseq
    %v782 = vshrl.u32 %v781, 7
    %v783 = vsub.s32 %v780, %v782
    %v784 = vrot.slane %v731, %v783
    %v786 = vunpack.c.l.s4 1983009808
    %v787 = vunpack.c.0.s8 %v786
    %v788 = vlaneseq
    %v789 = vshrl.u32 %v788, 7
    %v790 = vsub.s32 %v787, %v789
    %v791 = vrot.slane %v777, %v790
    %v792 = vcombine.high %v784, %v784
    %v793 = vcombine.high %v791, %v791
    %v794 = vcombine.high %v736, %v736
    %v796 = vunpack.c.l.s4 1983009808
    %v797 = vunpack.c.0.s8 %v796
    %v798 = vlaneseq
    %v799 = vshrl.u32 %v798, 7
    %v800 = vsub.s32 %v797, %v799
    %v801 = vrot.slane %v736, %v800
    %v803 = vunpack.c.l.s4 1983009808
    %v804 = vunpack.c.0.s8 %v803
    %v805 = vlaneseq
    %v806 = vshrl.u32 %v805, 7
    %v807 = vsub.s32 %v804, %v806
    %v808 = vrot.slane %v794, %v807
    %v809 = vcombine.high %v801, %v801
    %vm810 = vcmask 1040384
    %vm811 = vcmask 1042434
    %vm812 = vmor %vm810, %vm811
    %vm813 = vcmask 1044484
    %vm814 = vmor %vm812, %vm813
    %vm815 = vcmask 1046534
    %vm816 = vmor %vm814, %vm815
    %v817 = vrot.slane %v750, 7
    %v818 = vrot.slane %v817, 2
    %v819 = vrot.slane %v758, 7
    %v820 = vsel %vm816, %v818, %v819
    %v821 = vrot.slane %v819, 2
    %v822 = vrot.slane %v757, 7
    %v823 = vsel %vm816, %v821, %v822
    %v824 = vrot.slane %v822, 2
    %v825 = vrot.slane %v759, 7
    %v826 = vsel %vm816, %v824, %v825
    %v827 = vrot.slane %v825, 2
    %v828 = vrot.slane %v767, 7
    %v829 = vsel %vm816, %v827, %v828
    %v830 = vrot.slane %v828, 2
    %v831 = vrot.slane %v775, 7
    %v832 = vrot.slane %v831, 2
    %v833 = vrot.slane %v774, 7
    %v834 = vsel %vm816, %v832, %v833
    %v835 = vrot.slane %v833, 2
    %v836 = vrot.slane %v776, 7
    %v837 = vsel %vm816, %v835, %v836
    %v838 = vrot.slane %v836, 2
    %v839 = vrot.slane %v784, 7
    %v840 = vsel %vm816, %v838, %v839
    %v841 = vrot.slane %v839, 2
    %v842 = vrot.slane %v792, 7
    %v843 = vsel %vm816, %v841, %v842
    %v844 = vrot.slane %v842, 2
    %v845 = vrot.slane %v791, 7
    %v846 = vrot.slane %v845, 2
    %v847 = vrot.slane %v793, 7
    %v848 = vsel %vm816, %v846, %v847
    %v849 = vrot.slane %v847, 2
    %v850 = vrot.slane %v801, 7
    %v851 = vsel %vm816, %v849, %v850
    %v852 = vrot.slane %v850, 2
    %v853 = vrot.slane %v809, 7
    %v854 = vsel %vm816, %v852, %v853
    %v855 = vrot.slane %v853, 2
    %v856 = vrot.slane %v808, 7
    %v857 = vsel %vm816, %v855, %v856
    %v858 = vrot.slane %v856, 2
    %v874 = vadd.f32 %v575, %v820
    %v875 = vadd.f32 %v583, %v823
    %v876 = vadd.f32 %v582, %v826
    %v877 = vadd.f32 %v584, %v829
    %v878 = vadd.f32 %v592, %v830
    %v879 = vadd.f32 %v600, %v834
    %v880 = vadd.f32 %v599, %v837
    %v881 = vadd.f32 %v601, %v840
    %v882 = vadd.f32 %v609, %v843
    %v883 = vadd.f32 %v617, %v844
    %v884 = vadd.f32 %v616, %v848
    %v885 = vadd.f32 %v618, %v851
    %v886 = vadd.f32 %v626, %v854
    %v887 = vadd.f32 %v634, %v857
    %v888 = vadd.f32 %v633, %v858
    %v889 = vld [vmem:[%s8] sm:$0x1]
    %v891 = vlaneseq
    %v892 = vshrl.u32 %v891, 7
    %v893 = vsub.s32 0, %v892
    %v894 = vrot.slane %v889, %v893
    %v895 = vcombine.high %v894, %v894
    %v897 = vunpack.c.l.s4 1983009808
    %v898 = vunpack.c.0.s8 %v897
    %v899 = vlaneseq
    %v900 = vshrl.u32 %v899, 7
    %v901 = vsub.s32 %v898, %v900
    %v902 = vrot.slane %v894, %v901
    %v904 = vunpack.c.l.s4 1983009808
    %v905 = vunpack.c.0.s8 %v904
    %v906 = vlaneseq
    %v907 = vshrl.u32 %v906, 7
    %v908 = vsub.s32 %v905, %v907
    %v909 = vrot.slane %v895, %v908
    %v910 = vcombine.high %v902, %v902
    %v911 = vcombine.high %v909, %v909
    %v916 = vadd.f32 %v874, %v902
    %v917 = vadd.f32 %v875, %v910
    %v918 = vadd.f32 %v876, %v909
    %v919 = vadd.f32 %v877, %v911
    %v920 = vadd.f32 %v878, %v902
    %v921 = vadd.f32 %v879, %v902
    %v922 = vadd.f32 %v880, %v910
    %v923 = vadd.f32 %v881, %v909
    %v924 = vadd.f32 %v882, %v911
    %v925 = vadd.f32 %v883, %v902
    %v926 = vadd.f32 %v884, %v902
    %v927 = vadd.f32 %v885, %v910
    %v928 = vadd.f32 %v886, %v909
    %v929 = vadd.f32 %v887, %v911
    %v930 = vadd.f32 %v888, %v902
    %v931 = vmax.f32 %v916, 0.0
    %v932 = vmax.f32 %v917, 0.0
    %v933 = vmax.f32 %v918, 0.0
    %v934 = vmax.f32 %v919, 0.0
    %v935 = vmax.f32 %v920, 0.0
    %v936 = vmax.f32 %v921, 0.0
    %v937 = vmax.f32 %v922, 0.0
    %v938 = vmax.f32 %v923, 0.0
    %v939 = vmax.f32 %v924, 0.0
    %v940 = vmax.f32 %v925, 0.0
    %v941 = vmax.f32 %v926, 0.0
    %v942 = vmax.f32 %v927, 0.0
    %v943 = vmax.f32 %v928, 0.0
    %v944 = vmax.f32 %v929, 0.0
    %v945 = vmax.f32 %v930, 0.0
    %v949 = vrot.slane %v931, 7
    %v950 = vrot.slane %v949, 2
    %v951 = vrot.slane %v936, 7
    %v952 = vrot.slane %v951, 2
    %v953 = vrot.slane %v941, 7
    %v954 = vrot.slane %v953, 2
    %v958 = vmax.f32 %v931, %v950
    %v959 = vmax.f32 %v936, %v952
    %v960 = vmax.f32 %v941, %v954
    %v961 = vmax.f32 %v958, %v932
    %v962 = vmax.f32 %v959, %v937
    %v963 = vmax.f32 %v960, %v942
    %v967 = vrot.slane %v932, 7
    %v968 = vrot.slane %v967, 2
    %v969 = vrot.slane %v937, 7
    %v970 = vrot.slane %v969, 2
    %v971 = vrot.slane %v942, 7
    %v972 = vrot.slane %v971, 2
    %v976 = vmax.f32 %v961, %v968
    %v977 = vmax.f32 %v962, %v970
    %v978 = vmax.f32 %v963, %v972
    %v979 = vmax.f32 %v976, %v933
    %v980 = vmax.f32 %v977, %v938
    %v981 = vmax.f32 %v978, %v943
    %v985 = vrot.slane %v933, 7
    %v986 = vrot.slane %v985, 2
    %v987 = vrot.slane %v938, 7
    %v988 = vrot.slane %v987, 2
    %v989 = vrot.slane %v943, 7
    %v990 = vrot.slane %v989, 2
    %v994 = vmax.f32 %v979, %v986
    %v995 = vmax.f32 %v980, %v988
    %v996 = vmax.f32 %v981, %v990
    %v997 = vmax.f32 %v994, %v934
    %v998 = vmax.f32 %v995, %v939
    %v999 = vmax.f32 %v996, %v944
    %v1003 = vrot.slane %v934, 7
    %v1004 = vrot.slane %v1003, 2
    %v1005 = vrot.slane %v939, 7
    %v1006 = vrot.slane %v1005, 2
    %v1007 = vrot.slane %v944, 7
    %v1008 = vrot.slane %v1007, 2
    %v1012 = vmax.f32 %v997, %v1004
    %v1013 = vmax.f32 %v998, %v1006
    %v1014 = vmax.f32 %v999, %v1008
    %v1015 = vmax.f32 %v1012, %v935
    %v1016 = vmax.f32 %v1013, %v940
    %v1017 = vmax.f32 %v1014, %v945
    %v1018 = vld [vmem:[%s9] sm:$0xff]
    %v1019 = vld [vmem:[%s9 + $0x8] sm:$0xff]
    %v1020 = vld [vmem:[%s9 + $0x10] sm:$0xff]
    %v1021 = vld [vmem:[%s9 + $0x18] sm:$0xff]
    %1022 = vmatprep.subr.mxu0 0.0
    %1023 = vmatpush1.msra.mxu0 %v1018
    %1024 = vmatprep.subr.mxu0 0.0
    %1025 = vmatpush1.msra.mxu0 %v1019
    %1026 = vmatprep.subr.mxu0 0.0
    %1027 = vmatpush1.msra.mxu0 %v1020
    %1028 = vmatprep.subr.mxu0 0.0
    %1029 = vmatpush1.msra.mxu0 %v1021
    %1030 = vmatprep.subr.mxu0 0.0
    %1031 = vmatpush1.msra.mxu0 0.0
    %1032 = vmatprep.subr.mxu0 0.0
    %1033 = vmatpush1.msra.mxu0 0.0
    %1034 = vmatprep.subr.mxu0 0.0
    %1035 = vmatpush1.msra.mxu0 0.0
    %1036 = vmatprep.subr.mxu0 0.0
    %1037 = vmatpush1.msra.mxu0 0.0
    %1038 = vmatprep.subr.mxu0 0.0
    %1039 = vmatpush1.msra.mxu0 0.0
    %1040 = vmatprep.subr.mxu0 0.0
    %1041 = vmatpush1.msra.mxu0 0.0
    %1042 = vmatprep.subr.mxu0 0.0
    %1043 = vmatpush1.msra.mxu0 0.0
    %1044 = vmatprep.subr.mxu0 0.0
    %1045 = vmatpush1.msra.mxu0 0.0
    %1046 = vmatprep.subr.mxu0 0.0
    %1047 = vmatpush1.msra.mxu0 0.0
    %1048 = vmatprep.subr.mxu0 0.0
    %1049 = vmatpush1.msra.mxu0 0.0
    %1050 = vmatprep.subr.mxu0 0.0
    %1051 = vmatpush1.msra.mxu0 0.0
    %1052 = vmatprep.subr.mxu0 0.0
    %1053 = vmatpush1.msra.mxu0 0.0
    %1054 = vmatprep.subr.mxu0 0.0
    %1055 = vmatpush1.msra.mxu0 0.0
    %1056 = vmatprep.subr.mxu0 0.0
    %1057 = vmatpush1.msra.mxu0 0.0
    %1058 = vmatprep.subr.mxu0 0.0
    %1059 = vmatpush1.msra.mxu0 0.0
    %1060 = vmatprep.subr.mxu0 0.0
    %1061 = vmatpush1.msra.mxu0 0.0
    %1062 = vmatprep.subr.mxu0 0.0
    %1063 = vmatpush1.msra.mxu0 0.0
    %1064 = vmatprep.subr.mxu0 0.0
    %1065 = vmatpush1.msra.mxu0 0.0
    %1066 = vmatprep.subr.mxu0 0.0
    %1067 = vmatpush1.msra.mxu0 0.0
    %1068 = vmatprep.subr.mxu0 0.0
    %1069 = vmatpush1.msra.mxu0 0.0
    %1070 = vmatprep.subr.mxu0 0.0
    %1071 = vmatpush1.msra.mxu0 0.0
    %1072 = vmatprep.subr.mxu0 0.0
    %1073 = vmatpush1.msra.mxu0 0.0
    %1074 = vmatprep.subr.mxu0 0.0
    %1075 = vmatpush1.msra.mxu0 0.0
    %1076 = vmatprep.subr.mxu0 0.0
    %1077 = vmatpush1.msra.mxu0 0.0
    %1078 = vmatprep.subr.mxu0 0.0
    %1079 = vmatpush1.msra.mxu0 0.0
    %1080 = vmatprep.subr.mxu0 0.0
    %1081 = vmatpush1.msra.mxu0 0.0
    %1082 = vmatprep.subr.mxu0 0.0
    %1083 = vmatpush1.msra.mxu0 0.0
    %1084 = vmatprep.subr.mxu0 0.0
    %1085 = vmatpush1.msra.mxu0 0.0
    %1086 = vmatprep.mubr.f32.mxu0 0.0
    %1087 = vmatmul.mubr.f32.gmra.mrb[0].mxu0 %v468
    %v1088 = vpop.f32.mrb[0].mxu0
    %v1089 = vadd.f32 0.0, %v1088
    %v1090 = vpop.f32.mrb[0].mxu0
    %1091 = vmatprep.mubr.f32.mxu0 0.0
    %1092 = vmatmul.mubr.f32.gmra.mrb[0].mxu0 %v471
    %v1093 = vpop.f32.mrb[0].mxu0
    %v1094 = vadd.f32 0.0, %v1093
    %v1095 = vpop.f32.mrb[0].mxu0
    %1096 = vmatprep.mubr.f32.mxu0 0.0
    %1097 = vmatmul.mubr.f32.gmra.mrb[0].mxu0 %v474
    %v1098 = vpop.f32.mrb[0].mxu0
    %v1099 = vadd.f32 0.0, %v1098
    %v1100 = vpop.f32.mrb[0].mxu0
    %1101 = vmatprep.mubr.f32.mxu0 0.0
    %1102 = vmatmul.mubr.f32.gmra.mrb[0].mxu0 %v477
    %v1103 = vpop.f32.mrb[0].mxu0
    %v1104 = vadd.f32 0.0, %v1103
    %v1105 = vpop.f32.mrb[0].mxu0
    %1106 = vdwg.mxu0
    %v1111 = vcombine.high %v1089, %v1089
    %v1113 = vunpack.c.l.s4 1983009808
    %v1114 = vunpack.c.0.s8 %v1113
    %v1115 = vlaneseq
    %v1116 = vshrl.u32 %v1115, 7
    %v1117 = vsub.s32 %v1114, %v1116
    %v1118 = vrot.slane %v1089, %v1117
    %v1120 = vunpack.c.l.s4 1983009808
    %v1121 = vunpack.c.0.s8 %v1120
    %v1122 = vlaneseq
    %v1123 = vshrl.u32 %v1122, 7
    %v1124 = vsub.s32 %v1121, %v1123
    %v1125 = vrot.slane %v1111, %v1124
    %v1126 = vcombine.high %v1118, %v1118
    %v1127 = vcombine.high %v1125, %v1125
    %v1128 = vcombine.high %v1094, %v1094
    %v1130 = vunpack.c.l.s4 1983009808
    %v1131 = vunpack.c.0.s8 %v1130
    %v1132 = vlaneseq
    %v1133 = vshrl.u32 %v1132, 7
    %v1134 = vsub.s32 %v1131, %v1133
    %v1135 = vrot.slane %v1094, %v1134
    %v1137 = vunpack.c.l.s4 1983009808
    %v1138 = vunpack.c.0.s8 %v1137
    %v1139 = vlaneseq
    %v1140 = vshrl.u32 %v1139, 7
    %v1141 = vsub.s32 %v1138, %v1140
    %v1142 = vrot.slane %v1128, %v1141
    %v1143 = vcombine.high %v1135, %v1135
    %v1144 = vcombine.high %v1142, %v1142
    %v1145 = vcombine.high %v1099, %v1099
    %v1147 = vunpack.c.l.s4 1983009808
    %v1148 = vunpack.c.0.s8 %v1147
    %v1149 = vlaneseq
    %v1150 = vshrl.u32 %v1149, 7
    %v1151 = vsub.s32 %v1148, %v1150
    %v1152 = vrot.slane %v1099, %v1151
    %v1154 = vunpack.c.l.s4 1983009808
    %v1155 = vunpack.c.0.s8 %v1154
    %v1156 = vlaneseq
    %v1157 = vshrl.u32 %v1156, 7
    %v1158 = vsub.s32 %v1155, %v1157
    %v1159 = vrot.slane %v1145, %v1158
    %v1160 = vcombine.high %v1159, %v1159
    %v1162 = vunpack.c.l.s4 1983009808
    %v1163 = vunpack.c.0.s8 %v1162
    %v1164 = vlaneseq
    %v1165 = vshrl.u32 %v1164, 7
    %v1166 = vsub.s32 %v1163, %v1165
    %v1167 = vrot.slane %v1104, %v1166
    %v1168 = vcombine.high %v1167, %v1167
    %v1181 = vld [vmem:[%s10] sm:$0xff]
    %v1182 = vld [vmem:[%s10 + $0x8] sm:$0xff]
    %v1183 = vld [vmem:[%s10 + $0x10] sm:$0xff]
    %v1184 = vld [vmem:[%s10 + $0x18] sm:$0xff]
    %1185 = vmatprep.subr.mxu0 0.0
    %1186 = vmatpush1.msra.mxu0 %v1181
    %1187 = vmatprep.subr.mxu0 0.0
    %1188 = vmatpush1.msra.mxu0 %v1182
    %1189 = vmatprep.subr.mxu0 0.0
    %1190 = vmatpush1.msra.mxu0 %v1183
    %1191 = vmatprep.subr.mxu0 0.0
    %1192 = vmatpush1.msra.mxu0 %v1184
    %1193 = vmatprep.subr.mxu0 0.0
    %1194 = vmatpush1.msra.mxu0 0.0
    %1195 = vmatprep.subr.mxu0 0.0
    %1196 = vmatpush1.msra.mxu0 0.0
    %1197 = vmatprep.subr.mxu0 0.0
    %1198 = vmatpush1.msra.mxu0 0.0
    %1199 = vmatprep.subr.mxu0 0.0
    %1200 = vmatpush1.msra.mxu0 0.0
    %1201 = vmatprep.subr.mxu0 0.0
    %1202 = vmatpush1.msra.mxu0 0.0
    %1203 = vmatprep.subr.mxu0 0.0
    %1204 = vmatpush1.msra.mxu0 0.0
    %1205 = vmatprep.subr.mxu0 0.0
    %1206 = vmatpush1.msra.mxu0 0.0
    %1207 = vmatprep.subr.mxu0 0.0
    %1208 = vmatpush1.msra.mxu0 0.0
    %1209 = vmatprep.subr.mxu0 0.0
    %1210 = vmatpush1.msra.mxu0 0.0
    %1211 = vmatprep.subr.mxu0 0.0
    %1212 = vmatpush1.msra.mxu0 0.0
    %1213 = vmatprep.subr.mxu0 0.0
    %1214 = vmatpush1.msra.mxu0 0.0
    %1215 = vmatprep.subr.mxu0 0.0
    %1216 = vmatpush1.msra.mxu0 0.0
    %1217 = vmatprep.subr.mxu0 0.0
    %1218 = vmatpush1.msra.mxu0 0.0
    %1219 = vmatprep.subr.mxu0 0.0
    %1220 = vmatpush1.msra.mxu0 0.0
    %1221 = vmatprep.subr.mxu0 0.0
    %1222 = vmatpush1.msra.mxu0 0.0
    %1223 = vmatprep.subr.mxu0 0.0
    %1224 = vmatpush1.msra.mxu0 0.0
    %1225 = vmatprep.subr.mxu0 0.0
    %1226 = vmatpush1.msra.mxu0 0.0
    %1227 = vmatprep.subr.mxu0 0.0
    %1228 = vmatpush1.msra.mxu0 0.0
    %1229 = vmatprep.subr.mxu0 0.0
    %1230 = vmatpush1.msra.mxu0 0.0
    %1231 = vmatprep.subr.mxu0 0.0
    %1232 = vmatpush1.msra.mxu0 0.0
    %1233 = vmatprep.subr.mxu0 0.0
    %1234 = vmatpush1.msra.mxu0 0.0
    %1235 = vmatprep.subr.mxu0 0.0
    %1236 = vmatpush1.msra.mxu0 0.0
    %1237 = vmatprep.subr.mxu0 0.0
    %1238 = vmatpush1.msra.mxu0 0.0
    %1239 = vmatprep.subr.mxu0 0.0
    %1240 = vmatpush1.msra.mxu0 0.0
    %1241 = vmatprep.subr.mxu0 0.0
    %1242 = vmatpush1.msra.mxu0 0.0
    %1243 = vmatprep.subr.mxu0 0.0
    %1244 = vmatpush1.msra.mxu0 0.0
    %1245 = vmatprep.subr.mxu0 0.0
    %1246 = vmatpush1.msra.mxu0 0.0
    %1247 = vmatprep.subr.mxu0 0.0
    %1248 = vmatpush1.msra.mxu0 0.0
    %1249 = vmatprep.mubr.f32.mxu0 0.0
    %1250 = vmatmul.mubr.f32.gmra.mrb[0].mxu0 %v468
    %v1251 = vpop.f32.mrb[0].mxu0
    %v1252 = vadd.f32 0.0, %v1251
    %v1253 = vpop.f32.mrb[0].mxu0
    %1254 = vmatprep.mubr.f32.mxu0 0.0
    %1255 = vmatmul.mubr.f32.gmra.mrb[0].mxu0 %v471
    %v1256 = vpop.f32.mrb[0].mxu0
    %v1257 = vadd.f32 0.0, %v1256
    %v1258 = vpop.f32.mrb[0].mxu0
    %1259 = vmatprep.mubr.f32.mxu0 0.0
    %1260 = vmatmul.mubr.f32.gmra.mrb[0].mxu0 %v474
    %v1261 = vpop.f32.mrb[0].mxu0
    %v1262 = vadd.f32 0.0, %v1261
    %v1263 = vpop.f32.mrb[0].mxu0
    %1264 = vmatprep.mubr.f32.mxu0 0.0
    %1265 = vmatmul.mubr.f32.gmra.mrb[0].mxu0 %v477
    %v1266 = vpop.f32.mrb[0].mxu0
    %v1267 = vadd.f32 0.0, %v1266
    %v1268 = vpop.f32.mrb[0].mxu0
    %1269 = vdwg.mxu0
    %v1274 = vcombine.high %v1252, %v1252
    %v1276 = vunpack.c.l.s4 1983009808
    %v1277 = vunpack.c.0.s8 %v1276
    %v1278 = vlaneseq
    %v1279 = vshrl.u32 %v1278, 7
    %v1280 = vsub.s32 %v1277, %v1279
    %v1281 = vrot.slane %v1252, %v1280
    %v1283 = vunpack.c.l.s4 1983009808
    %v1284 = vunpack.c.0.s8 %v1283
    %v1285 = vlaneseq
    %v1286 = vshrl.u32 %v1285, 7
    %v1287 = vsub.s32 %v1284, %v1286
    %v1288 = vrot.slane %v1274, %v1287
    %v1289 = vcombine.high %v1281, %v1281
    %v1290 = vcombine.high %v1288, %v1288
    %v1291 = vcombine.high %v1257, %v1257
    %v1293 = vunpack.c.l.s4 1983009808
    %v1294 = vunpack.c.0.s8 %v1293
    %v1295 = vlaneseq
    %v1296 = vshrl.u32 %v1295, 7
    %v1297 = vsub.s32 %v1294, %v1296
    %v1298 = vrot.slane %v1257, %v1297
    %v1300 = vunpack.c.l.s4 1983009808
    %v1301 = vunpack.c.0.s8 %v1300
    %v1302 = vlaneseq
    %v1303 = vshrl.u32 %v1302, 7
    %v1304 = vsub.s32 %v1301, %v1303
    %v1305 = vrot.slane %v1291, %v1304
    %v1306 = vcombine.high %v1298, %v1298
    %v1307 = vcombine.high %v1305, %v1305
    %v1308 = vcombine.high %v1262, %v1262
    %v1310 = vunpack.c.l.s4 1983009808
    %v1311 = vunpack.c.0.s8 %v1310
    %v1312 = vlaneseq
    %v1313 = vshrl.u32 %v1312, 7
    %v1314 = vsub.s32 %v1311, %v1313
    %v1315 = vrot.slane %v1262, %v1314
    %v1317 = vunpack.c.l.s4 1983009808
    %v1318 = vunpack.c.0.s8 %v1317
    %v1319 = vlaneseq
    %v1320 = vshrl.u32 %v1319, 7
    %v1321 = vsub.s32 %v1318, %v1320
    %v1322 = vrot.slane %v1308, %v1321
    %v1323 = vcombine.high %v1315, %v1315
    %v1324 = vcombine.high %v1322, %v1322
    %v1325 = vcombine.high %v1267, %v1267
    %v1327 = vunpack.c.l.s4 1983009808
    %v1328 = vunpack.c.0.s8 %v1327
    %v1329 = vlaneseq
    %v1330 = vshrl.u32 %v1329, 7
    %v1331 = vsub.s32 %v1328, %v1330
    %v1332 = vrot.slane %v1267, %v1331
    %v1334 = vunpack.c.l.s4 1983009808
    %v1335 = vunpack.c.0.s8 %v1334
    %v1336 = vlaneseq
    %v1337 = vshrl.u32 %v1336, 7
    %v1338 = vsub.s32 %v1335, %v1337
    %v1339 = vrot.slane %v1325, %v1338
    %v1340 = vcombine.high %v1332, %v1332
    %v1341 = vrot.slane %v1281, 7
    %v1342 = vrot.slane %v1341, 2
    %v1343 = vrot.slane %v1289, 7
    %v1344 = vsel %vm816, %v1342, %v1343
    %v1345 = vrot.slane %v1343, 2
    %v1346 = vrot.slane %v1288, 7
    %v1347 = vsel %vm816, %v1345, %v1346
    %v1348 = vrot.slane %v1346, 2
    %v1349 = vrot.slane %v1290, 7
    %v1350 = vsel %vm816, %v1348, %v1349
    %v1351 = vrot.slane %v1349, 2
    %v1352 = vrot.slane %v1298, 7
    %v1353 = vsel %vm816, %v1351, %v1352
    %v1354 = vrot.slane %v1306, 7
    %v1355 = vrot.slane %v1354, 2
    %v1356 = vrot.slane %v1305, 7
    %v1357 = vsel %vm816, %v1355, %v1356
    %v1358 = vrot.slane %v1356, 2
    %v1359 = vrot.slane %v1307, 7
    %v1360 = vsel %vm816, %v1358, %v1359
    %v1361 = vrot.slane %v1359, 2
    %v1362 = vrot.slane %v1315, 7
    %v1363 = vsel %vm816, %v1361, %v1362
    %v1364 = vrot.slane %v1362, 2
    %v1365 = vrot.slane %v1323, 7
    %v1366 = vsel %vm816, %v1364, %v1365
    %v1367 = vrot.slane %v1322, 7
    %v1368 = vrot.slane %v1367, 2
    %v1369 = vrot.slane %v1324, 7
    %v1370 = vsel %vm816, %v1368, %v1369
    %v1371 = vrot.slane %v1369, 2
    %v1372 = vrot.slane %v1332, 7
    %v1373 = vsel %vm816, %v1371, %v1372
    %v1374 = vrot.slane %v1372, 2
    %v1375 = vrot.slane %v1340, 7
    %v1376 = vsel %vm816, %v1374, %v1375
    %v1377 = vrot.slane %v1375, 2
    %v1378 = vrot.slane %v1339, 7
    %v1379 = vsel %vm816, %v1377, %v1378
    %v1392 = vadd.f32 %v1118, %v1344
    %v1393 = vadd.f32 %v1126, %v1347
    %v1394 = vadd.f32 %v1125, %v1350
    %v1395 = vadd.f32 %v1127, %v1353
    %v1396 = vadd.f32 %v1143, %v1357
    %v1397 = vadd.f32 %v1142, %v1360
    %v1398 = vadd.f32 %v1144, %v1363
    %v1399 = vadd.f32 %v1152, %v1366
    %v1400 = vadd.f32 %v1159, %v1370
    %v1401 = vadd.f32 %v1160, %v1373
    %v1402 = vadd.f32 %v1167, %v1376
    %v1403 = vadd.f32 %v1168, %v1379
    %v1404 = vld [vmem:[%s11] sm:$0xff]
    %v1405 = vld [vmem:[%s11 + $0x8] sm:$0xff]
    %v1406 = vld [vmem:[%s11 + $0x10] sm:$0xff]
    %v1407 = vld [vmem:[%s11 + $0x18] sm:$0xff]
    %1408 = vmatprep.subr.mxu0 0.0
    %1409 = vmatpush1.msra.mxu0 %v1404
    %1410 = vmatprep.subr.mxu0 0.0
    %1411 = vmatpush1.msra.mxu0 %v1405
    %1412 = vmatprep.subr.mxu0 0.0
    %1413 = vmatpush1.msra.mxu0 %v1406
    %1414 = vmatprep.subr.mxu0 0.0
    %1415 = vmatpush1.msra.mxu0 %v1407
    %1416 = vmatprep.subr.mxu0 0.0
    %1417 = vmatpush1.msra.mxu0 0.0
    %1418 = vmatprep.subr.mxu0 0.0
    %1419 = vmatpush1.msra.mxu0 0.0
    %1420 = vmatprep.subr.mxu0 0.0
    %1421 = vmatpush1.msra.mxu0 0.0
    %1422 = vmatprep.subr.mxu0 0.0
    %1423 = vmatpush1.msra.mxu0 0.0
    %1424 = vmatprep.subr.mxu0 0.0
    %1425 = vmatpush1.msra.mxu0 0.0
    %1426 = vmatprep.subr.mxu0 0.0
    %1427 = vmatpush1.msra.mxu0 0.0
    %1428 = vmatprep.subr.mxu0 0.0
    %1429 = vmatpush1.msra.mxu0 0.0
    %1430 = vmatprep.subr.mxu0 0.0
    %1431 = vmatpush1.msra.mxu0 0.0
    %1432 = vmatprep.subr.mxu0 0.0
    %1433 = vmatpush1.msra.mxu0 0.0
    %1434 = vmatprep.subr.mxu0 0.0
    %1435 = vmatpush1.msra.mxu0 0.0
    %1436 = vmatprep.subr.mxu0 0.0
    %1437 = vmatpush1.msra.mxu0 0.0
    %1438 = vmatprep.subr.mxu0 0.0
    %1439 = vmatpush1.msra.mxu0 0.0
    %1440 = vmatprep.subr.mxu0 0.0
    %1441 = vmatpush1.msra.mxu0 0.0
    %1442 = vmatprep.subr.mxu0 0.0
    %1443 = vmatpush1.msra.mxu0 0.0
    %1444 = vmatprep.subr.mxu0 0.0
    %1445 = vmatpush1.msra.mxu0 0.0
    %1446 = vmatprep.subr.mxu0 0.0
    %1447 = vmatpush1.msra.mxu0 0.0
    %1448 = vmatprep.subr.mxu0 0.0
    %1449 = vmatpush1.msra.mxu0 0.0
    %1450 = vmatprep.subr.mxu0 0.0
    %1451 = vmatpush1.msra.mxu0 0.0
    %1452 = vmatprep.subr.mxu0 0.0
    %1453 = vmatpush1.msra.mxu0 0.0
    %1454 = vmatprep.subr.mxu0 0.0
    %1455 = vmatpush1.msra.mxu0 0.0
    %1456 = vmatprep.subr.mxu0 0.0
    %1457 = vmatpush1.msra.mxu0 0.0
    %1458 = vmatprep.subr.mxu0 0.0
    %1459 = vmatpush1.msra.mxu0 0.0
    %1460 = vmatprep.subr.mxu0 0.0
    %1461 = vmatpush1.msra.mxu0 0.0
    %1462 = vmatprep.subr.mxu0 0.0
    %1463 = vmatpush1.msra.mxu0 0.0
    %1464 = vmatprep.subr.mxu0 0.0
    %1465 = vmatpush1.msra.mxu0 0.0
    %1466 = vmatprep.subr.mxu0 0.0
    %1467 = vmatpush1.msra.mxu0 0.0
    %1468 = vmatprep.subr.mxu0 0.0
    %1469 = vmatpush1.msra.mxu0 0.0
    %1470 = vmatprep.subr.mxu0 0.0
    %1471 = vmatpush1.msra.mxu0 0.0
    %1472 = vmatprep.mubr.f32.mxu0 0.0
    %1473 = vmatmul.mubr.f32.gmra.mrb[0].mxu0 %v468
    %v1474 = vpop.f32.mrb[0].mxu0
    %v1475 = vadd.f32 0.0, %v1474
    %v1476 = vpop.f32.mrb[0].mxu0
    %1477 = vmatprep.mubr.f32.mxu0 0.0
    %1478 = vmatmul.mubr.f32.gmra.mrb[0].mxu0 %v471
    %v1479 = vpop.f32.mrb[0].mxu0
    %v1480 = vadd.f32 0.0, %v1479
    %v1481 = vpop.f32.mrb[0].mxu0
    %1482 = vmatprep.mubr.f32.mxu0 0.0
    %1483 = vmatmul.mubr.f32.gmra.mrb[0].mxu0 %v474
    %v1484 = vpop.f32.mrb[0].mxu0
    %v1485 = vadd.f32 0.0, %v1484
    %v1486 = vpop.f32.mrb[0].mxu0
    %1487 = vmatprep.mubr.f32.mxu0 0.0
    %1488 = vmatmul.mubr.f32.gmra.mrb[0].mxu0 %v477
    %v1489 = vpop.f32.mrb[0].mxu0
    %v1490 = vadd.f32 0.0, %v1489
    %v1491 = vpop.f32.mrb[0].mxu0
    %1492 = vdwg.mxu0
    %v1497 = vcombine.high %v1475, %v1475
    %v1499 = vunpack.c.l.s4 1983009808
    %v1500 = vunpack.c.0.s8 %v1499
    %v1501 = vlaneseq
    %v1502 = vshrl.u32 %v1501, 7
    %v1503 = vsub.s32 %v1500, %v1502
    %v1504 = vrot.slane %v1475, %v1503
    %v1506 = vunpack.c.l.s4 1983009808
    %v1507 = vunpack.c.0.s8 %v1506
    %v1508 = vlaneseq
    %v1509 = vshrl.u32 %v1508, 7
    %v1510 = vsub.s32 %v1507, %v1509
    %v1511 = vrot.slane %v1497, %v1510
    %v1512 = vcombine.high %v1504, %v1504
    %v1513 = vcombine.high %v1511, %v1511
    %v1514 = vcombine.high %v1480, %v1480
    %v1516 = vunpack.c.l.s4 1983009808
    %v1517 = vunpack.c.0.s8 %v1516
    %v1518 = vlaneseq
    %v1519 = vshrl.u32 %v1518, 7
    %v1520 = vsub.s32 %v1517, %v1519
    %v1521 = vrot.slane %v1480, %v1520
    %v1523 = vunpack.c.l.s4 1983009808
    %v1524 = vunpack.c.0.s8 %v1523
    %v1525 = vlaneseq
    %v1526 = vshrl.u32 %v1525, 7
    %v1527 = vsub.s32 %v1524, %v1526
    %v1528 = vrot.slane %v1514, %v1527
    %v1529 = vcombine.high %v1528, %v1528
    %v1530 = vcombine.high %v1485, %v1485
    %v1532 = vunpack.c.l.s4 1983009808
    %v1533 = vunpack.c.0.s8 %v1532
    %v1534 = vlaneseq
    %v1535 = vshrl.u32 %v1534, 7
    %v1536 = vsub.s32 %v1533, %v1535
    %v1537 = vrot.slane %v1485, %v1536
    %v1539 = vunpack.c.l.s4 1983009808
    %v1540 = vunpack.c.0.s8 %v1539
    %v1541 = vlaneseq
    %v1542 = vshrl.u32 %v1541, 7
    %v1543 = vsub.s32 %v1540, %v1542
    %v1544 = vrot.slane %v1530, %v1543
    %v1545 = vcombine.high %v1537, %v1537
    %v1546 = vcombine.high %v1544, %v1544
    %v1547 = vcombine.high %v1490, %v1490
    %v1549 = vunpack.c.l.s4 1983009808
    %v1550 = vunpack.c.0.s8 %v1549
    %v1551 = vlaneseq
    %v1552 = vshrl.u32 %v1551, 7
    %v1553 = vsub.s32 %v1550, %v1552
    %v1554 = vrot.slane %v1490, %v1553
    %v1556 = vunpack.c.l.s4 1983009808
    %v1557 = vunpack.c.0.s8 %v1556
    %v1558 = vlaneseq
    %v1559 = vshrl.u32 %v1558, 7
    %v1560 = vsub.s32 %v1557, %v1559
    %v1561 = vrot.slane %v1547, %v1560
    %v1562 = vcombine.high %v1554, %v1554
    %v1575 = vadd.f32 %v1392, %v1512
    %v1576 = vadd.f32 %v1393, %v1511
    %v1577 = vadd.f32 %v1394, %v1513
    %v1578 = vadd.f32 %v1395, %v1521
    %v1579 = vadd.f32 %v1396, %v1528
    %v1580 = vadd.f32 %v1397, %v1529
    %v1581 = vadd.f32 %v1398, %v1537
    %v1582 = vadd.f32 %v1399, %v1545
    %v1583 = vadd.f32 %v1400, %v1546
    %v1584 = vadd.f32 %v1401, %v1554
    %v1585 = vadd.f32 %v1402, %v1562
    %v1586 = vadd.f32 %v1403, %v1561
    %v1587 = vld [vmem:[%s12] sm:$0x1]
    %v1589 = vlaneseq
    %v1590 = vshrl.u32 %v1589, 7
    %v1591 = vsub.s32 0, %v1590
    %v1592 = vrot.slane %v1587, %v1591
    %v1593 = vcombine.high %v1592, %v1592
    %v1595 = vunpack.c.l.s4 1983009808
    %v1596 = vunpack.c.0.s8 %v1595
    %v1597 = vlaneseq
    %v1598 = vshrl.u32 %v1597, 7
    %v1599 = vsub.s32 %v1596, %v1598
    %v1600 = vrot.slane %v1592, %v1599
    %v1602 = vunpack.c.l.s4 1983009808
    %v1603 = vunpack.c.0.s8 %v1602
    %v1604 = vlaneseq
    %v1605 = vshrl.u32 %v1604, 7
    %v1606 = vsub.s32 %v1603, %v1605
    %v1607 = vrot.slane %v1593, %v1606
    %v1608 = vcombine.high %v1600, %v1600
    %v1609 = vcombine.high %v1607, %v1607
    %v1614 = vadd.f32 %v1575, %v1600
    %v1615 = vadd.f32 %v1576, %v1608
    %v1616 = vadd.f32 %v1577, %v1607
    %v1617 = vadd.f32 %v1578, %v1609
    %v1618 = vadd.f32 %v1579, %v1600
    %v1619 = vadd.f32 %v1580, %v1608
    %v1620 = vadd.f32 %v1581, %v1607
    %v1621 = vadd.f32 %v1582, %v1609
    %v1622 = vadd.f32 %v1583, %v1600
    %v1623 = vadd.f32 %v1584, %v1608
    %v1624 = vadd.f32 %v1585, %v1607
    %v1625 = vadd.f32 %v1586, %v1609
    %v1626 = vmax.f32 %v1614, 0.0
    %v1627 = vmax.f32 %v1615, 0.0
    %v1628 = vmax.f32 %v1616, 0.0
    %v1629 = vmax.f32 %v1617, 0.0
    %v1630 = vmax.f32 %v1618, 0.0
    %v1631 = vmax.f32 %v1619, 0.0
    %v1632 = vmax.f32 %v1620, 0.0
    %v1633 = vmax.f32 %v1621, 0.0
    %v1634 = vmax.f32 %v1622, 0.0
    %v1635 = vmax.f32 %v1623, 0.0
    %v1636 = vmax.f32 %v1624, 0.0
    %v1637 = vmax.f32 %v1625, 0.0
    %v1641 = vrot.slane %v1626, 7
    %v1642 = vrot.slane %v1641, 2
    %v1643 = vrot.slane %v1630, 7
    %v1644 = vrot.slane %v1643, 2
    %v1645 = vrot.slane %v1634, 7
    %v1646 = vrot.slane %v1645, 2
    %v1650 = vmax.f32 %v1626, %v1642
    %v1651 = vmax.f32 %v1630, %v1644
    %v1652 = vmax.f32 %v1634, %v1646
    %v1653 = vmax.f32 %v1650, %v1627
    %v1654 = vmax.f32 %v1651, %v1631
    %v1655 = vmax.f32 %v1652, %v1635
    %v1659 = vrot.slane %v1627, 7
    %v1660 = vrot.slane %v1659, 2
    %v1661 = vrot.slane %v1631, 7
    %v1662 = vrot.slane %v1661, 2
    %v1663 = vrot.slane %v1635, 7
    %v1664 = vrot.slane %v1663, 2
    %v1668 = vmax.f32 %v1653, %v1660
    %v1669 = vmax.f32 %v1654, %v1662
    %v1670 = vmax.f32 %v1655, %v1664
    %v1671 = vmax.f32 %v1668, %v1628
    %v1672 = vmax.f32 %v1669, %v1632
    %v1673 = vmax.f32 %v1670, %v1636
    %v1677 = vrot.slane %v1628, 7
    %v1678 = vrot.slane %v1677, 2
    %v1679 = vrot.slane %v1632, 7
    %v1680 = vrot.slane %v1679, 2
    %v1681 = vrot.slane %v1636, 7
    %v1682 = vrot.slane %v1681, 2
    %v1686 = vmax.f32 %v1671, %v1678
    %v1687 = vmax.f32 %v1672, %v1680
    %v1688 = vmax.f32 %v1673, %v1682
    %v1689 = vmax.f32 %v1686, %v1629
    %v1690 = vmax.f32 %v1687, %v1633
    %v1691 = vmax.f32 %v1688, %v1637
    %v1695 = vrot.slane %v1629, 7
    %v1696 = vrot.slane %v1695, 2
    %v1697 = vrot.slane %v1633, 7
    %v1698 = vrot.slane %v1697, 2
    %v1699 = vrot.slane %v1637, 7
    %v1700 = vrot.slane %v1699, 2
    %v1704 = vmax.f32 %v1689, %v1696
    %v1705 = vmax.f32 %v1690, %v1698
    %v1706 = vmax.f32 %v1691, %v1700
    %v1710 = vlaneseq
    %v1711 = vshrl.u32 %v1710, 7
    %v1712 = vsub.s32 0, %v1711
    %v1713 = vrot.slane %v1015, %v1712
    %v1714 = vlaneseq
    %v1715 = vshrl.u32 %v1714, 7
    %v1716 = vsub.s32 0, %v1715
    %v1717 = vrot.slane %v1016, %v1716
    %v1718 = vlaneseq
    %v1719 = vshrl.u32 %v1718, 7
    %v1720 = vsub.s32 0, %v1719
    %v1721 = vrot.slane %v1017, %v1720
    %vm1722 = vcmask 1041409
    %v1723 = vsel %vm1722, %v1717, %v1713
    %v1724 = vsel %vm811, %v1721, %v1723
    %v1729 = vlaneseq
    %v1730 = vshrl.u32 %v1729, 7
    %v1731 = vsub.s32 0, %v1730
    %v1732 = vrot.slane %v1704, %v1731
    %v1733 = vlaneseq
    %v1734 = vshrl.u32 %v1733, 7
    %v1735 = vsub.s32 0, %v1734
    %v1736 = vrot.slane %v1705, %v1735
    %v1737 = vlaneseq
    %v1738 = vshrl.u32 %v1737, 7
    %v1739 = vsub.s32 0, %v1738
    %v1740 = vrot.slane %v1706, %v1739
    %v1741 = vsel %vm1722, %v1736, %v1732
    %v1742 = vsel %vm811, %v1740, %v1741
    %1743 = vrot.lane.b32.xlu0 %v1742, 16
    %v1744 = vpop.permute.xlu0 %1743
    %vm1746 = vcmask 130048
    %v1747 = vsel %vm1746, %v1724, %v1744
    %v1748 = vld [vmem:[%s13] sm:$0xff]
    %v1749 = vld [vmem:[%s13 + $0x8] sm:$0xff]
    %v1750 = vld [vmem:[%s13 + $0x10] sm:$0xff]
    %v1751 = vld [vmem:[%s13 + $0x18] sm:$0xff]
    %v1752 = vld [vmem:[%s14] sm:$0x1]
    %v1754 = vlaneseq
    %v1755 = vshrl.u32 %v1754, 7
    %v1756 = vsub.s32 0, %v1755
    %v1757 = vrot.slane %v1752, %v1756
    %v1760 = vsel %vm192, %v1747, 0
    %1762 = vmatprep.subr.mxu0 0.0
    %1763 = vmatpush1.msra.mxu0 %v1748
    %1764 = vmatprep.subr.mxu0 0.0
    %1765 = vmatpush1.msra.mxu0 %v1749
    %1766 = vmatprep.subr.mxu0 0.0
    %1767 = vmatpush1.msra.mxu0 %v1750
    %1768 = vmatprep.subr.mxu0 0.0
    %1769 = vmatpush1.msra.mxu0 %v1751
    %1770 = vmatprep.subr.mxu0 0.0
    %1771 = vmatpush1.msra.mxu0 0.0
    %1772 = vmatprep.subr.mxu0 0.0
    %1773 = vmatpush1.msra.mxu0 0.0
    %1774 = vmatprep.subr.mxu0 0.0
    %1775 = vmatpush1.msra.mxu0 0.0
    %1776 = vmatprep.subr.mxu0 0.0
    %1777 = vmatpush1.msra.mxu0 0.0
    %1778 = vmatprep.subr.mxu0 0.0
    %1779 = vmatpush1.msra.mxu0 0.0
    %1780 = vmatprep.subr.mxu0 0.0
    %1781 = vmatpush1.msra.mxu0 0.0
    %1782 = vmatprep.subr.mxu0 0.0
    %1783 = vmatpush1.msra.mxu0 0.0
    %1784 = vmatprep.subr.mxu0 0.0
    %1785 = vmatpush1.msra.mxu0 0.0
    %1786 = vmatprep.subr.mxu0 0.0
    %1787 = vmatpush1.msra.mxu0 0.0
    %1788 = vmatprep.subr.mxu0 0.0
    %1789 = vmatpush1.msra.mxu0 0.0
    %1790 = vmatprep.subr.mxu0 0.0
    %1791 = vmatpush1.msra.mxu0 0.0
    %1792 = vmatprep.subr.mxu0 0.0
    %1793 = vmatpush1.msra.mxu0 0.0
    %1794 = vmatprep.subr.mxu0 0.0
    %1795 = vmatpush1.msra.mxu0 0.0
    %1796 = vmatprep.subr.mxu0 0.0
    %1797 = vmatpush1.msra.mxu0 0.0
    %1798 = vmatprep.subr.mxu0 0.0
    %1799 = vmatpush1.msra.mxu0 0.0
    %1800 = vmatprep.subr.mxu0 0.0
    %1801 = vmatpush1.msra.mxu0 0.0
    %1802 = vmatprep.subr.mxu0 0.0
    %1803 = vmatpush1.msra.mxu0 0.0
    %1804 = vmatprep.subr.mxu0 0.0
    %1805 = vmatpush1.msra.mxu0 0.0
    %1806 = vmatprep.subr.mxu0 0.0
    %1807 = vmatpush1.msra.mxu0 0.0
    %1808 = vmatprep.subr.mxu0 0.0
    %1809 = vmatpush1.msra.mxu0 0.0
    %1810 = vmatprep.subr.mxu0 0.0
    %1811 = vmatpush1.msra.mxu0 0.0
    %1812 = vmatprep.subr.mxu0 0.0
    %1813 = vmatpush1.msra.mxu0 0.0
    %1814 = vmatprep.subr.mxu0 0.0
    %1815 = vmatpush1.msra.mxu0 0.0
    %1816 = vmatprep.subr.mxu0 0.0
    %1817 = vmatpush1.msra.mxu0 0.0
    %1818 = vmatprep.subr.mxu0 0.0
    %1819 = vmatpush1.msra.mxu0 0.0
    %1820 = vmatprep.subr.mxu0 0.0
    %1821 = vmatpush1.msra.mxu0 0.0
    %1822 = vmatprep.subr.mxu0 0.0
    %1823 = vmatpush1.msra.mxu0 0.0
    %1824 = vmatprep.subr.mxu0 0.0
    %1825 = vmatpush1.msra.mxu0 0.0
    %1826 = vmatprep.mubr.f32.mxu0 0.0
    %1827 = vmatmul.mubr.f32.gmra.mrb[0].mxu0 %v1760
    %v1828 = vpop.f32.mrb[0].mxu0
    %v1829 = vadd.f32 %v1757, %v1828
    %v1830 = vpop.f32.mrb[0].mxu0
    %1831 = vdwg.mxu0
    %v1832 = vmul.f32 %v1829, 0.5
    %v1833 = vmul.f32 %v1829, 0.044715
    %v1834 = vmul.f32 %v1833, %v1829
    %v1835 = vmul.f32 %v1834, %v1829
    %v1836 = vadd.f32 %v1829, %v1835
    %v1837 = vmul.f32 %v1836, 0.7978846
    %v1838 = vtanh.pop %v1837
    %v1839 = vadd.f32 %v1838, 1.0
    %v1840 = vmul.f32 %v1832, %v1839
    %v1841 = vld [vmem:[%s15] sm:$0xff]
    %v1842 = vld [vmem:[%s15 + $0x8] sm:$0xff]
    %v1843 = vld [vmem:[%s15 + $0x10] sm:$0xff]
    %v1844 = vld [vmem:[%s15 + $0x18] sm:$0xff]
    %v1845 = vld [vmem:[%s16] sm:$0x1]
    %v1847 = vlaneseq
    %v1848 = vshrl.u32 %v1847, 7
    %v1849 = vsub.s32 0, %v1848
    %v1850 = vrot.slane %v1845, %v1849
    %v1853 = vsel %vm192, %v1840, 0
    %1855 = vmatprep.subr.mxu0 0.0
    %1856 = vmatpush1.msra.mxu0 %v1841
    %1857 = vmatprep.subr.mxu0 0.0
    %1858 = vmatpush1.msra.mxu0 %v1842
    %1859 = vmatprep.subr.mxu0 0.0
    %1860 = vmatpush1.msra.mxu0 %v1843
    %1861 = vmatprep.subr.mxu0 0.0
    %1862 = vmatpush1.msra.mxu0 %v1844
    %1863 = vmatprep.subr.mxu0 0.0
    %1864 = vmatpush1.msra.mxu0 0.0
    %1865 = vmatprep.subr.mxu0 0.0
    %1866 = vmatpush1.msra.mxu0 0.0
    %1867 = vmatprep.subr.mxu0 0.0
    %1868 = vmatpush1.msra.mxu0 0.0
    %1869 = vmatprep.subr.mxu0 0.0
    %1870 = vmatpush1.msra.mxu0 0.0
    %1871 = vmatprep.subr.mxu0 0.0
    %1872 = vmatpush1.msra.mxu0 0.0
    %1873 = vmatprep.subr.mxu0 0.0
    %1874 = vmatpush1.msra.mxu0 0.0
    %1875 = vmatprep.subr.mxu0 0.0
    %1876 = vmatpush1.msra.mxu0 0.0
    %1877 = vmatprep.subr.mxu0 0.0
    %1878 = vmatpush1.msra.mxu0 0.0
    %1879 = vmatprep.subr.mxu0 0.0
    %1880 = vmatpush1.msra.mxu0 0.0
    %1881 = vmatprep.subr.mxu0 0.0
    %1882 = vmatpush1.msra.mxu0 0.0
    %1883 = vmatprep.subr.mxu0 0.0
    %1884 = vmatpush1.msra.mxu0 0.0
    %1885 = vmatprep.subr.mxu0 0.0
    %1886 = vmatpush1.msra.mxu0 0.0
    %1887 = vmatprep.subr.mxu0 0.0
    %1888 = vmatpush1.msra.mxu0 0.0
    %1889 = vmatprep.subr.mxu0 0.0
    %1890 = vmatpush1.msra.mxu0 0.0
    %1891 = vmatprep.subr.mxu0 0.0
    %1892 = vmatpush1.msra.mxu0 0.0
    %1893 = vmatprep.subr.mxu0 0.0
    %1894 = vmatpush1.msra.mxu0 0.0
    %1895 = vmatprep.subr.mxu0 0.0
    %1896 = vmatpush1.msra.mxu0 0.0
    %1897 = vmatprep.subr.mxu0 0.0
    %1898 = vmatpush1.msra.mxu0 0.0
    %1899 = vmatprep.subr.mxu0 0.0
    %1900 = vmatpush1.msra.mxu0 0.0
    %1901 = vmatprep.subr.mxu0 0.0
    %1902 = vmatpush1.msra.mxu0 0.0
    %1903 = vmatprep.subr.mxu0 0.0
    %1904 = vmatpush1.msra.mxu0 0.0
    %1905 = vmatprep.subr.mxu0 0.0
    %1906 = vmatpush1.msra.mxu0 0.0
    %1907 = vmatprep.subr.mxu0 0.0
    %1908 = vmatpush1.msra.mxu0 0.0
    %1909 = vmatprep.subr.mxu0 0.0
    %1910 = vmatpush1.msra.mxu0 0.0
    %1911 = vmatprep.subr.mxu0 0.0
    %1912 = vmatpush1.msra.mxu0 0.0
    %1913 = vmatprep.subr.mxu0 0.0
    %1914 = vmatpush1.msra.mxu0 0.0
    %1915 = vmatprep.subr.mxu0 0.0
    %1916 = vmatpush1.msra.mxu0 0.0
    %1917 = vmatprep.subr.mxu0 0.0
    %1918 = vmatpush1.msra.mxu0 0.0
    %1919 = vmatprep.mubr.f32.mxu0 0.0
    %1920 = vmatmul.mubr.f32.gmra.mrb[0].mxu0 %v1853
    %v1921 = vpop.f32.mrb[0].mxu0
    %v1922 = vadd.f32 %v1850, %v1921
    %v1923 = vpop.f32.mrb[0].mxu0
    %1924 = vdwg.mxu0
    %v1925 = vld [vmem:[%s17] sm:$0x7]
    %vm1926 = vcmask 1042432
    %v1927 = vsel %vm1926, %v1922, -inf
    %1928 = vmax.xlane.f32.xlu0 %v1927
    %v1929 = vpop.xlane.xlu0 %1928
    %v1930 = vsub.f32 %v1922, %v1929
    %v1931 = vmul.f32 %v1930, 1.442695
    %v1932 = vpow.pop %v1931
    %v1933 = vsel %vm1926, %v1932, 0.0
    %1934 = vadd.xlane.f32.xlu0 %v1933
    %v1935 = vpop.xlane.xlu0 %1934
    %v1936 = vlog2.pop %v1935
    %v1937 = vmul.f32 %v1936, 0.6931472
    %v1938 = vadd.f32 %v1929, %v1937
    %1939 = vset.pattern.permute.xlu0 0
    %1940 = vperm.xlu0 %1939, %v1925
    %v1941 = vpop.permute.xlu0 %1940
    %vm1942 = vcmp.eq.s32.totalorder %v77, %v1941
    %v1943 = vsel %vm1942, %v1922, 0.0
    %v1944 = vsel %vm1926, %v1943, 0.0
    %1945 = vadd.xlane.f32.xlu0 %v1944
    %v1946 = vpop.xlane.xlu0 %1945
    %v1947 = vsub.f32 %v1938, %v1946
    %v1948 = vsel %vm1926, %v1947, 0.0
    %v1949 = vrot.slane %v1948, 4
    %v1950 = vadd.f32 %v1948, %v1949
    %v1951 = vrot.slane %v1950, 2
    %v1952 = vadd.f32 %v1950, %v1951
    %v1953 = vrot.slane %v1952, 1
    %v1954 = vadd.f32 %v1952, %v1953
    %v1955 = vrcp.pop 3.0
    %v1956 = vmul.f32 %v1954, %v1955
    %vm1957 = vcmask 0
    %1958 = vst.msk [vmem:[#allocation2] sm:$0x1] %vm1957, %v1956
    // Predicated region
    $region74: #{_typing_forward.1} parent=1 // pred_check
      _
    $region75: #{_typing_forward.1} parent=1 // pred_check_branch
      %1960 = sbr.rel (0) target = $region77
    $region76: #{_typing_forward.1} parent=1 // pred_region
      %s1962 = ssub.s32 16, 16
      %1963 = vsyncadd [#allocation3], %s1962
      %s1965 = sshll.u32 [#allocation2], 4
      %s1966 = int_to_ptr.vmem [resolvable:$true] %s1965
      %1968 = dma.vmem_to_hbm [thread:$0]  %s1966, 16, %s18, [#allocation3]
    $region77: #{_typing_forward.1} parent=1 // pred_fallthru
      _
    // Predicated region
    $region78: #{_typing_forward.1} parent=1 // pred_check
      _
    $region79: #{_typing_forward.1} parent=1 // pred_check_branch
      %1970 = sbr.rel (0) target = $region81
    $region80: #{_typing_forward.1} parent=1 // pred_region
      %1971 = dma.done [#allocation3], 16
    $region81: #{_typing_forward.1} parent=1 // pred_fallthru
      _
    %1972 = vsyncpa [#allocation3], 1

</llo_original>
